<compile_context>
chip_gen: v5e
topology: v5e:2x2
jax: 0.10.0
libtpu: 0.0.40
codegen_flags: <defaults>
</compile_context>

<pallas_src>
from functools import partial

import numpy as np
import jax
import jax.numpy as jnp
from jax.experimental import pallas as pl
from jax.experimental.pallas import tpu as pltpu

# ---- configuration (stands in for the PSPHead / BaseDecodeHead attributes) ----
IN_CHANNELS = 16          # self.in_channels
CHANNELS = 8              # self.channels
NUM_CLASSES = 5           # self.num_classes (cls_seg output)
POOL_SCALES = (1, 2, 3, 6)
H = W = 12                # divisible by every pool scale -> adaptive pool is exact
N = 2
EPS = 1e-5                # BatchNorm eps
NEG = -1e30               # "kill this entry through the ReLU" bias (f32/bf16 only!)

# ---- fused / padded layout constants ----
W_PAD = 16                                           # row stride: W + 4 zero guard cols
HW = H * W                                           # 144  (dense y*W+x layout, kernel I/O)
HW_PAD = H * W_PAD                                   # 192  (guard layout)
HWL = 256                                            # lane-padded guard layout (mult of 128)
SS = sum(s * s for s in POOL_SCALES)                 # 50 pooled cells over all scales
SSP = 128                                            # lane-padded pooled axis
CTOT = IN_CHANNELS + len(POOL_SCALES) * CHANNELS     # 48 channels after concat
KCOL = 9 * CTOT                                      # 432: im2col reduction depth

assert W_PAD > W and HWL % 128 == 0 and HWL >= HW_PAD + W_PAD + 2 and SSP >= SS


# ----------------------------- glue: linear operators -----------------------------
def adaptive_pool_matrix(size_in, size_out):
    """(size_out, size_in) matrix reproducing nn.AdaptiveAvgPool1d."""
    P = np.zeros((size_out, size_in), np.float32)
    for o in range(size_out):
        start = (o * size_in) // size_out
        end = -((-(o + 1) * size_in) // size_out)  # ceil((o+1)*in/out)
        P[o, start:end] = 1.0 / (end - start)
    return P


def bilinear_upsample_matrix(size_in, size_out):
    """(size_out, size_in) matrix reproducing F.interpolate(bilinear, align_corners=False)."""
    U = np.zeros((size_out, size_in), np.float32)
    for i in range(size_out):
        src = (i + 0.5) * size_in / size_out - 0.5
        if src < 0.0:
            src = 0.0
        i0 = int(np.floor(src))
        i1 = min(i0 + 1, size_in - 1)
        w1 = src - i0
        U[i, i0] += 1.0 - w1
        U[i, i1] += w1
    return U


def fold_bn(gamma, beta, mean, var):
    scale = gamma / jnp.sqrt(var + EPS)
    shift = beta - mean * scale
    return scale, shift


# ----------------------------------- kernel -----------------------------------
def psp_head_kernel(x_ref, pcat_ref, w1_ref, bbias_ref, ubig_ref, emb_ref,
                    embt_ref, w3_ref, shift3_ref, wcls_ref, bcls_ref,
                    out_ref, feat_ref, col_ref, *, wp):
    """Whole PSPHead for one image (one grid step), fully VMEM-resident.

    Layouts (channels on sublanes, spatial on lanes):
      x_ref      (Cin, HW)      dense y*W+x layout (block of the (N,Cin,HW) input)
      pcat_ref   (HW, SSP)      stacked adaptive-pool operator (pad cols zero)
      w1_ref     (4*Cmid, Cin)  stacked 1x1 PPM conv weights (BN scale folded)
      bbias_ref  (4*Cmid, SSP)  BN shift inside own branch's pooled cols, NEG elsewhere
      ubig_ref   (SSP, HWL)     stacked bilinear-upsample operator into the guard layout
      emb_ref    (HW, HWL)      0/1 embedding dense -> guard layout (row stride wp)
      embt_ref   (HWL, HW)      its transpose (de-embedding for the output)
      w3_ref     (Cmid, 9*Ctot) 3x3 bottleneck weights, 9 taps stacked on K (BN folded)
      shift3_ref (Cmid, 1)      bottleneck BN shift
      wcls_ref   (ncls, Cmid)   cls_seg 1x1 conv weight
      bcls_ref   (ncls, 1)      cls_seg bias
      out_ref    (ncls, HW)     logits, dense layout
      feat_ref   (Ctot, HWL)    VMEM scratch: concat([x] + branches) in guard layout
      col_ref    (9*Ctot, HWL)  VMEM scratch: im2col of the 3x3 conv
    """
    cin, hw = x_ref.shape
    ctot, hwl = feat_ref.shape

    x2 = x_ref[...]                                                            # (Cin, HW)

    # ---- all four PPM branches in three lane-dense matmuls ----
    pooled = jnp.dot(x2, pcat_ref[...], preferred_element_type=jnp.float32)     # (Cin, SSP)
    t = jnp.dot(w1_ref[...], pooled, preferred_element_type=jnp.float32)        # (4*Cmid, SSP)
    a = jnp.maximum(t + bbias_ref[...], 0.0)                                    # BN shift + ReLU (+ branch/pad kill)
    branches = jnp.dot(a, ubig_ref[...], preferred_element_type=jnp.float32)    # (4*Cmid, HWL)

    # ---- concat([x] + psp_outs) via slice-stores into the feat scratch (guard layout) ----
    # x is embedded into the guard layout with a 0/1 matmul; guard/pad columns stay zero,
    # which is exactly the zero padding the 3x3 conv needs (so no per-tap masks below).
    feat_ref[:cin, :] = jnp.dot(x2, emb_ref[...], preferred_element_type=jnp.float32)
    feat_ref[cin:, :] = branches
    feat = feat_ref[...]                                                        # (Ctot, HWL)

    # ---- 3x3 conv (padding=1) as ONE K=9*Ctot matmul over an in-VMEM im2col ----
    # TODO(synk): pltpu.roll could replace jnp.roll if the ext slot ever saturates.
    k = 0
    for dy in (-1, 0, 1):
        for dx in (-1, 0, 1):
            d = dy * wp + dx                                                     # neighbour offset
            col_ref[k * ctot:(k + 1) * ctot, :] = (
                feat if d == 0 else jnp.roll(feat, -d, axis=1))                  # rolled[p] = feat[p + d]
            k += 1
    acc = jnp.dot(w3_ref[...], col_ref[...], preferred_element_type=jnp.float32)  # (Cmid, HWL)
    hbot = jnp.maximum(acc + shift3_ref[...], 0.0)                               # BN shift + ReLU

    # ---- cls_seg (Dropout2d is identity in eval) + de-embed back to the dense layout ----
    logits = jnp.dot(wcls_ref[...], hbot, preferred_element_type=jnp.float32)    # (ncls, HWL)
    out_ref[...] = jnp.dot(logits, embt_ref[...],
                           preferred_element_type=jnp.float32) + bcls_ref[...]   # (ncls, HW)


# ------------------------------- pallas wrapper -------------------------------
def psp_head_forward(x_nchw, fp):
    """x_nchw: (N, IN_CHANNELS, H, W)  ->  logits (N, NUM_CLASSES, H, W)."""
    n, cin, h, w = x_nchw.shape
    hw = h * w
    # Metadata-only reshape (contiguous trailing-dim merge) -> no extra XLA kernel.
    x3 = x_nchw.reshape(n, cin, hw)

    vmem = pl.BlockSpec(memory_space=pltpu.MemorySpace.VMEM)
    out = pl.pallas_call(
        partial(psp_head_kernel, wp=W_PAD),
        out_shape=jax.ShapeDtypeStruct((n, NUM_CLASSES, hw), jnp.float32),
        grid=(n,),
        in_specs=[pl.BlockSpec((None, cin, hw), lambda b: (b, 0, 0))] + [vmem] * 10,
        out_specs=pl.BlockSpec((None, NUM_CLASSES, hw), lambda b: (b, 0, 0)),
        scratch_shapes=[pltpu.VMEM((CTOT, HWL), jnp.float32),      # feat (concat result)
                        pltpu.VMEM((KCOL, HWL), jnp.float32)],     # im2col for the 3x3 conv
        compiler_params=pltpu.CompilerParams(
            dimension_semantics=("parallel",)),                    # one image per TC on v7x
        # TODO(synk): real-size path needs bf16 operands, K/spatial tiling and an explicit
        # vmem_limit_bytes (<64 MiB on v7x).
    )(x3, fp["pcat"], fp["w1"], fp["b"], fp["ubig"], fp["emb"], fp["embT"],
      fp["w3"], fp["shift3"], fp["wcls"], fp["bcls"])

    return out.reshape(n, NUM_CLASSES, h, w)   # metadata-only reshape


# ------------------------------- parameter init -------------------------------
def init_raw_params(key):
    """Unfused, PyTorch-layout-like parameters (also used by the pure-JAX reference)."""
    ctot = IN_CHANNELS + len(POOL_SCALES) * CHANNELS
    keys = jax.random.split(key, 2 * len(POOL_SCALES) + 4)
    ppm = []
    for si, s in enumerate(POOL_SCALES):
        w1 = 0.1 * jax.random.normal(keys[2 * si], (CHANNELS, IN_CHANNELS), jnp.float32)
        gamma = 1.0 + 0.1 * jax.random.normal(keys[2 * si + 1], (CHANNELS,), jnp.float32)
        scale, shift = fold_bn(gamma, 0.05 * jnp.ones((CHANNELS,)),
                               0.02 * jnp.ones((CHANNELS,)), jnp.ones((CHANNELS,)))
        Ph = adaptive_pool_matrix(H, s)
        Pw = adaptive_pool_matrix(W, s)
        Uh = bilinear_upsample_matrix(s, H)
        Uw = bilinear_upsample_matrix(s, W)
        ppm.append(dict(
            w1=w1, bn_scale=scale, bn_shift=shift,
            mpool=jnp.asarray(np.kron(Ph, Pw)),   # (s*s, H*W)
            mup=jnp.asarray(np.kron(Uh, Uw)),     # (H*W, s*s)
        ))
    k3, kbn, kc, kcb = keys[-4:]
    w3 = 0.05 * jax.random.normal(k3, (3, 3, ctot, CHANNELS), jnp.float32)      # HWIO
    gamma3 = 1.0 + 0.1 * jax.random.normal(kbn, (CHANNELS,), jnp.float32)
    bn3_scale, bn3_shift = fold_bn(gamma3, 0.05 * jnp.ones((CHANNELS,)),
                                   0.02 * jnp.ones((CHANNELS,)), jnp.ones((CHANNELS,)))
    wcls = 0.1 * jax.random.normal(kc, (NUM_CLASSES, CHANNELS), jnp.float32)
    bcls = 0.01 * jax.random.normal(kcb, (NUM_CLASSES,), jnp.float32)
    return dict(ppm=ppm, w3=w3, bn3_scale=bn3_scale, bn3_shift=bn3_shift,
                wcls=wcls, bcls=bcls)


def build_fused_params(raw, h, w):
    """Fold BN into weights and build the padded per-image operators for the fused kernel."""
    hw = h * w
    sizes = [s * s for s in POOL_SCALES]
    col_off = np.cumsum([0] + sizes)
    ss = int(col_off[-1])
    assert ss == SS
    ctot = IN_CHANNELS + len(POOL_SCALES) * CHANNELS

    # 0/1 embedding from the dense y*W+x layout into the zero-guard layout y*W_PAD+x.
    valid = (np.arange(h)[:, None] * W_PAD + np.arange(w)[None, :]).reshape(-1)   # (hw,)
    emb = np.zeros((hw, HWL), np.float32)
    emb[np.arange(hw), valid] = 1.0

    pcat = np.zeros((hw, SSP), np.float32)
    ubig = np.zeros((SSP, HWL), np.float32)
    w1_all = np.zeros((len(POOL_SCALES) * CHANNELS, IN_CHANNELS), np.float32)
    bmat = np.full((len(POOL_SCALES) * CHANNELS, SSP), NEG, np.float32)

    for si, (s, p) in enumerate(zip(POOL_SCALES, raw["ppm"])):
        sq = s * s
        o = int(col_off[si])
        mpool = np.asarray(p["mpool"])                  # (sq, hw)
        mup = np.asarray(p["mup"])                      # (hw, sq)
        pcat[:, o:o + sq] = mpool.T
        ubig[o:o + sq, :] = mup.T @ emb                 # scatter into the guard layout
        w1_all[si * CHANNELS:(si + 1) * CHANNELS, :] = (
            np.asarray(p["w1"]) * np.asarray(p["bn_scale"])[:, None])
        bmat[si * CHANNELS:(si + 1) * CHANNELS, o:o + sq] = (
            np.asarray(p["bn_shift"])[:, None])

    # bottleneck 3x3 weights, 9 taps stacked along K (BN scale folded); tap order (dy,dx) row-major
    w3 = np.asarray(raw["w3"])                          # (3,3,Ctot,Cmid), HWIO
    s3 = np.asarray(raw["bn3_scale"])
    w3cat = np.zeros((CHANNELS, 9 * ctot), np.float32)
    for i in range(3):
        for j in range(3):
            k = i * 3 + j
            w3cat[:, k * ctot:(k + 1) * ctot] = w3[i, j].T * s3[:, None]

    return dict(
        pcat=jnp.asarray(pcat), w1=jnp.asarray(w1_all), b=jnp.asarray(bmat),
        ubig=jnp.asarray(ubig), emb=jnp.asarray(emb), embT=jnp.asarray(emb.T),
        w3=jnp.asarray(w3cat),
        shift3=jnp.asarray(np.asarray(raw["bn3_shift"])[:, None]),
        wcls=jnp.asarray(raw["wcls"]),
        bcls=jnp.asarray(np.asarray(raw["bcls"])[:, None]),
    )


# --------------------------- pure-JAX reference (unfused) ---------------------------
def reference_forward(x_nchw, raw):
    x = jnp.transpose(x_nchw, (0, 2, 3, 1)).astype(jnp.float32)     # NHWC
    n, h, w, cin = x.shape
    xf = x.reshape(n, h * w, cin)
    outs = [x]
    for p in raw["ppm"]:
        pooled = jnp.einsum("qp,npc->nqc", p["mpool"], xf)           # adaptive avg pool
        t = jnp.einsum("nqc,mc->nqm", pooled, p["w1"])               # conv1x1
        t = jnp.maximum(t * p["bn_scale"] + p["bn_shift"], 0.0)      # BN + ReLU
        up = jnp.einsum("pq,nqm->npm", p["mup"], t)                  # bilinear upsample
        outs.append(up.reshape(n, h, w, -1))
    feat = jnp.concatenate(outs, axis=-1)                            # (n,h,w,Ctot)
    featp = jnp.pad(feat, ((0, 0), (1, 1), (1, 1), (0, 0)))
    acc = jnp.zeros((n, h, w, CHANNELS), jnp.float32)
    for i in range(3):
        for j in range(3):
            acc = acc + jnp.einsum("nhwc,cm->nhwm",
                                   featp[:, i:i + h, j:j + w, :], raw["w3"][i, j])
    acc = jnp.maximum(acc * raw["bn3_scale"] + raw["bn3_shift"], 0.0)
    logits = jnp.einsum("nhwm,km->nhwk", acc, raw["wcls"]) + raw["bcls"]
    return jnp.transpose(logits, (0, 3, 1, 2))                       # NCHW


# --------------------------------- main ---------------------------------
if __name__ == "__main__":
    key = jax.random.PRNGKey(0)
    kx, kp = jax.random.split(key)
    # _transform_inputs with default input_transform picks a single feature map;
    # we pass that selected feature map directly.
    x = jax.random.normal(kx, (N, IN_CHANNELS, H, W), jnp.float32)
    raw = init_raw_params(kp)
    fused = build_fused_params(raw, H, W)

    fwd = jax.jit(lambda inp: psp_head_forward(inp, fused))
    out = jax.block_until_ready(fwd(x))

    assert out.shape == (N, NUM_CLASSES, H, W)
    assert out.dtype == jnp.float32
    assert bool(jnp.all(jnp.isfinite(out)))

    with jax.default_matmul_precision("highest"):
        ref = reference_forward(x, raw)
    max_err = float(jnp.max(jnp.abs(out - ref)))
    assert bool(jnp.allclose(out, ref, atol=1e-3, rtol=1e-3)), max_err

    print("KERNEL_OK")
</pallas_src>

<mosaic_0001>
module attributes {stable_mosaic.version = 11 : i64} {
  func.func @psp_head_kernel(%arg0: i32, %arg1: memref<1x16x144xf32, #tpu.memory_space<vmem>>, %arg2: memref<144x128xf32, #tpu.memory_space<vmem>>, %arg3: memref<32x16xf32, #tpu.memory_space<vmem>>, %arg4: memref<32x128xf32, #tpu.memory_space<vmem>>, %arg5: memref<128x256xf32, #tpu.memory_space<vmem>>, %arg6: memref<144x256xf32, #tpu.memory_space<vmem>>, %arg7: memref<256x144xf32, #tpu.memory_space<vmem>>, %arg8: memref<8x432xf32, #tpu.memory_space<vmem>>, %arg9: memref<8x1xf32, #tpu.memory_space<vmem>>, %arg10: memref<5x8xf32, #tpu.memory_space<vmem>>, %arg11: memref<5x1xf32, #tpu.memory_space<vmem>>, %arg12: memref<1x5x144xf32, #tpu.memory_space<vmem>>, %arg13: memref<48x256xf32, #tpu.memory_space<vmem>>, %arg14: memref<432x256xf32, #tpu.memory_space<vmem>>) attributes {dimension_semantics = [#tpu.dimension_semantics<parallel>], iteration_bounds = array<i64: 2>, scalar_prefetch = 0 : i64, scratch_operands = 2 : i64, tpu.core_type = #tpu.core_type<tc>, window_params = [{transform_indices = @transform_0, window_bounds = array<i64: 1, 16, 144>}, {pipeline_mode = #tpu.pipeline_mode<synchronous>, transform_indices = @transform_1, window_bounds = array<i64: 144, 128>}, {pipeline_mode = #tpu.pipeline_mode<synchronous>, transform_indices = @transform_2, window_bounds = array<i64: 32, 16>}, {pipeline_mode = #tpu.pipeline_mode<synchronous>, transform_indices = @transform_3, window_bounds = array<i64: 32, 128>}, {pipeline_mode = #tpu.pipeline_mode<synchronous>, transform_indices = @transform_4, window_bounds = array<i64: 128, 256>}, {pipeline_mode = #tpu.pipeline_mode<synchronous>, transform_indices = @transform_5, window_bounds = array<i64: 144, 256>}, {pipeline_mode = #tpu.pipeline_mode<synchronous>, transform_indices = @transform_6, window_bounds = array<i64: 256, 144>}, {pipeline_mode = #tpu.pipeline_mode<synchronous>, transform_indices = @transform_7, window_bounds = array<i64: 8, 432>}, {pipeline_mode = #tpu.pipeline_mode<synchronous>, transform_indices = @transform_8, window_bounds = array<i64: 8, 1>}, {pipeline_mode = #tpu.pipeline_mode<synchronous>, transform_indices = @transform_9, window_bounds = array<i64: 5, 8>}, {pipeline_mode = #tpu.pipeline_mode<synchronous>, transform_indices = @transform_10, window_bounds = array<i64: 5, 1>}, {transform_indices = @transform_11, window_bounds = array<i64: 1, 5, 144>}]} {
    %c0 = arith.constant 0 : index
    %c0_0 = arith.constant 0 : index
    %c0_1 = arith.constant 0 : index
    %0 = vector.load %arg1[%c0, %c0_0, %c0_1] : memref<1x16x144xf32, #tpu.memory_space<vmem>>, vector<1x16x144xf32>
    %1 = vector.shape_cast %0 : vector<1x16x144xf32> to vector<16x144xf32>
    %c0_2 = arith.constant 0 : index
    %c0_3 = arith.constant 0 : index
    %2 = vector.load %arg2[%c0_2, %c0_3] : memref<144x128xf32, #tpu.memory_space<vmem>>, vector<144x128xf32>
    %cst = arith.constant dense<0.000000e+00> : vector<16x128xf32>
    %3 = tpu.matmul %1, %2, %cst {dimension_numbers = #tpu.dot_dimension_numbers<[1], [0], [0], [1], [0, 0, 1, 1], [], []>} : vector<16x144xf32>, vector<144x128xf32>, vector<16x128xf32> -> vector<16x128xf32>
    %c0_4 = arith.constant 0 : index
    %c0_5 = arith.constant 0 : index
    %4 = vector.load %arg3[%c0_4, %c0_5] : memref<32x16xf32, #tpu.memory_space<vmem>>, vector<32x16xf32>
    %cst_6 = arith.constant dense<0.000000e+00> : vector<32x128xf32>
    %5 = tpu.matmul %4, %3, %cst_6 {dimension_numbers = #tpu.dot_dimension_numbers<[1], [0], [0], [1], [0, 0, 1, 1], [], []>} : vector<32x16xf32>, vector<16x128xf32>, vector<32x128xf32> -> vector<32x128xf32>
    %c0_7 = arith.constant 0 : index
    %c0_8 = arith.constant 0 : index
    %6 = vector.load %arg4[%c0_7, %c0_8] : memref<32x128xf32, #tpu.memory_space<vmem>>, vector<32x128xf32>
    %7 = arith.addf %5, %6 : vector<32x128xf32>
    %cst_9 = arith.constant 0.000000e+00 : f32
    %8 = vector.broadcast %cst_9 : f32 to vector<32x128xf32>
    %9 = arith.maximumf %7, %8 : vector<32x128xf32>
    %c0_10 = arith.constant 0 : index
    %c0_11 = arith.constant 0 : index
    %10 = vector.load %arg5[%c0_10, %c0_11] : memref<128x256xf32, #tpu.memory_space<vmem>>, vector<128x256xf32>
    %cst_12 = arith.constant dense<0.000000e+00> : vector<32x256xf32>
    %11 = tpu.matmul %9, %10, %cst_12 {dimension_numbers = #tpu.dot_dimension_numbers<[1], [0], [0], [1], [0, 0, 1, 1], [], []>} : vector<32x128xf32>, vector<128x256xf32>, vector<32x256xf32> -> vector<32x256xf32>
    %c0_13 = arith.constant 0 : index
    %c0_14 = arith.constant 0 : index
    %12 = vector.load %arg6[%c0_13, %c0_14] : memref<144x256xf32, #tpu.memory_space<vmem>>, vector<144x256xf32>
    %cst_15 = arith.constant dense<0.000000e+00> : vector<16x256xf32>
    %13 = tpu.matmul %1, %12, %cst_15 {dimension_numbers = #tpu.dot_dimension_numbers<[1], [0], [0], [1], [0, 0, 1, 1], [], []>} : vector<16x144xf32>, vector<144x256xf32>, vector<16x256xf32> -> vector<16x256xf32>
    %c0_16 = arith.constant 0 : index
    %c0_17 = arith.constant 0 : index
    %14 = vector.load %arg13[%c0_16, %c0_17] : memref<48x256xf32, #tpu.memory_space<vmem>>, vector<16x256xf32>
    tpu.vector_store %arg13[%c0_16, %c0_17], %13 {strides = array<i32>} : memref<48x256xf32, #tpu.memory_space<vmem>>, vector<16x256xf32>,
    %c16 = arith.constant 16 : index
    %c0_18 = arith.constant 0 : index
    %15 = vector.load %arg13[%c16, %c0_18] : memref<48x256xf32, #tpu.memory_space<vmem>>, vector<32x256xf32>
    tpu.vector_store %arg13[%c16, %c0_18], %11 {strides = array<i32>} : memref<48x256xf32, #tpu.memory_space<vmem>>, vector<32x256xf32>,
    %c0_19 = arith.constant 0 : index
    %c0_20 = arith.constant 0 : index
    %16 = vector.load %arg13[%c0_19, %c0_20] : memref<48x256xf32, #tpu.memory_space<vmem>>, vector<48x256xf32>
    %17 = vector.extract_strided_slice %16 {offsets = [0, 239], sizes = [48, 17], strides = [1, 1]} : vector<48x256xf32> to vector<48x17xf32>
    %18 = vector.extract_strided_slice %16 {offsets = [0, 0], sizes = [48, 239], strides = [1, 1]} : vector<48x256xf32> to vector<48x239xf32>
    %19 = tpu.concatenate %17, %18 in 1 : vector<48x17xf32>, vector<48x239xf32> -> vector<48x256xf32>
    %c0_21 = arith.constant 0 : index
    %c0_22 = arith.constant 0 : index
    %20 = vector.load %arg14[%c0_21, %c0_22] : memref<432x256xf32, #tpu.memory_space<vmem>>, vector<48x256xf32>
    tpu.vector_store %arg14[%c0_21, %c0_22], %19 {strides = array<i32>} : memref<432x256xf32, #tpu.memory_space<vmem>>, vector<48x256xf32>,
    %21 = vector.extract_strided_slice %16 {offsets = [0, 240], sizes = [48, 16], strides = [1, 1]} : vector<48x256xf32> to vector<48x16xf32>
    %22 = vector.extract_strided_slice %16 {offsets = [0, 0], sizes = [48, 240], strides = [1, 1]} : vector<48x256xf32> to vector<48x240xf32>
    %23 = tpu.concatenate %21, %22 in 1 : vector<48x16xf32>, vector<48x240xf32> -> vector<48x256xf32>
    %c48 = arith.constant 48 : index
    %c0_23 = arith.constant 0 : index
    %24 = vector.load %arg14[%c48, %c0_23] : memref<432x256xf32, #tpu.memory_space<vmem>>, vector<48x256xf32>
    tpu.vector_store %arg14[%c48, %c0_23], %23 {strides = array<i32>} : memref<432x256xf32, #tpu.memory_space<vmem>>, vector<48x256xf32>,
    %25 = vector.extract_strided_slice %16 {offsets = [0, 241], sizes = [48, 15], strides = [1, 1]} : vector<48x256xf32> to vector<48x15xf32>
    %26 = vector.extract_strided_slice %16 {offsets = [0, 0], sizes = [48, 241], strides = [1, 1]} : vector<48x256xf32> to vector<48x241xf32>
    %27 = tpu.concatenate %25, %26 in 1 : vector<48x15xf32>, vector<48x241xf32> -> vector<48x256xf32>
    %c96 = arith.constant 96 : index
    %c0_24 = arith.constant 0 : index
    %28 = vector.load %arg14[%c96, %c0_24] : memref<432x256xf32, #tpu.memory_space<vmem>>, vector<48x256xf32>
    tpu.vector_store %arg14[%c96, %c0_24], %27 {strides = array<i32>} : memref<432x256xf32, #tpu.memory_space<vmem>>, vector<48x256xf32>,
    %29 = vector.extract_strided_slice %16 {offsets = [0, 255], sizes = [48, 1], strides = [1, 1]} : vector<48x256xf32> to vector<48x1xf32>
    %30 = vector.extract_strided_slice %16 {offsets = [0, 0], sizes = [48, 255], strides = [1, 1]} : vector<48x256xf32> to vector<48x255xf32>
    %31 = tpu.concatenate %29, %30 in 1 : vector<48x1xf32>, vector<48x255xf32> -> vector<48x256xf32>
    %c144 = arith.constant 144 : index
    %c0_25 = arith.constant 0 : index
    %32 = vector.load %arg14[%c144, %c0_25] : memref<432x256xf32, #tpu.memory_space<vmem>>, vector<48x256xf32>
    tpu.vector_store %arg14[%c144, %c0_25], %31 {strides = array<i32>} : memref<432x256xf32, #tpu.memory_space<vmem>>, vector<48x256xf32>,
    %c192 = arith.constant 192 : index
    %c0_26 = arith.constant 0 : index
    %33 = vector.load %arg14[%c192, %c0_26] : memref<432x256xf32, #tpu.memory_space<vmem>>, vector<48x256xf32>
    tpu.vector_store %arg14[%c192, %c0_26], %16 {strides = array<i32>} : memref<432x256xf32, #tpu.memory_space<vmem>>, vector<48x256xf32>,
    %34 = vector.extract_strided_slice %16 {offsets = [0, 1], sizes = [48, 255], strides = [1, 1]} : vector<48x256xf32> to vector<48x255xf32>
    %35 = vector.extract_strided_slice %16 {offsets = [0, 0], sizes = [48, 1], strides = [1, 1]} : vector<48x256xf32> to vector<48x1xf32>
    %36 = tpu.concatenate %34, %35 in 1 : vector<48x255xf32>, vector<48x1xf32> -> vector<48x256xf32>
    %c240 = arith.constant 240 : index
    %c0_27 = arith.constant 0 : index
    %37 = vector.load %arg14[%c240, %c0_27] : memref<432x256xf32, #tpu.memory_space<vmem>>, vector<48x256xf32>
    tpu.vector_store %arg14[%c240, %c0_27], %36 {strides = array<i32>} : memref<432x256xf32, #tpu.memory_space<vmem>>, vector<48x256xf32>,
    %38 = vector.extract_strided_slice %16 {offsets = [0, 15], sizes = [48, 241], strides = [1, 1]} : vector<48x256xf32> to vector<48x241xf32>
    %39 = vector.extract_strided_slice %16 {offsets = [0, 0], sizes = [48, 15], strides = [1, 1]} : vector<48x256xf32> to vector<48x15xf32>
    %40 = tpu.concatenate %38, %39 in 1 : vector<48x241xf32>, vector<48x15xf32> -> vector<48x256xf32>
    %c288 = arith.constant 288 : index
    %c0_28 = arith.constant 0 : index
    %41 = vector.load %arg14[%c288, %c0_28] : memref<432x256xf32, #tpu.memory_space<vmem>>, vector<48x256xf32>
    tpu.vector_store %arg14[%c288, %c0_28], %40 {strides = array<i32>} : memref<432x256xf32, #tpu.memory_space<vmem>>, vector<48x256xf32>,
    %42 = vector.extract_strided_slice %16 {offsets = [0, 16], sizes = [48, 240], strides = [1, 1]} : vector<48x256xf32> to vector<48x240xf32>
    %43 = vector.extract_strided_slice %16 {offsets = [0, 0], sizes = [48, 16], strides = [1, 1]} : vector<48x256xf32> to vector<48x16xf32>
    %44 = tpu.concatenate %42, %43 in 1 : vector<48x240xf32>, vector<48x16xf32> -> vector<48x256xf32>
    %c336 = arith.constant 336 : index
    %c0_29 = arith.constant 0 : index
    %45 = vector.load %arg14[%c336, %c0_29] : memref<432x256xf32, #tpu.memory_space<vmem>>, vector<48x256xf32>
    tpu.vector_store %arg14[%c336, %c0_29], %44 {strides = array<i32>} : memref<432x256xf32, #tpu.memory_space<vmem>>, vector<48x256xf32>,
    %46 = vector.extract_strided_slice %16 {offsets = [0, 17], sizes = [48, 239], strides = [1, 1]} : vector<48x256xf32> to vector<48x239xf32>
    %47 = vector.extract_strided_slice %16 {offsets = [0, 0], sizes = [48, 17], strides = [1, 1]} : vector<48x256xf32> to vector<48x17xf32>
    %48 = tpu.concatenate %46, %47 in 1 : vector<48x239xf32>, vector<48x17xf32> -> vector<48x256xf32>
    %c384 = arith.constant 384 : index
    %c0_30 = arith.constant 0 : index
    %49 = vector.load %arg14[%c384, %c0_30] : memref<432x256xf32, #tpu.memory_space<vmem>>, vector<48x256xf32>
    tpu.vector_store %arg14[%c384, %c0_30], %48 {strides = array<i32>} : memref<432x256xf32, #tpu.memory_space<vmem>>, vector<48x256xf32>,
    %c0_31 = arith.constant 0 : index
    %c0_32 = arith.constant 0 : index
    %50 = vector.load %arg8[%c0_31, %c0_32] : memref<8x432xf32, #tpu.memory_space<vmem>>, vector<8x432xf32>
    %c0_33 = arith.constant 0 : index
    %c0_34 = arith.constant 0 : index
    %51 = vector.load %arg14[%c0_33, %c0_34] : memref<432x256xf32, #tpu.memory_space<vmem>>, vector<432x256xf32>
    %cst_35 = arith.constant dense<0.000000e+00> : vector<8x256xf32>
    %52 = tpu.matmul %50, %51, %cst_35 {dimension_numbers = #tpu.dot_dimension_numbers<[1], [0], [0], [1], [0, 0, 1, 1], [], []>} : vector<8x432xf32>, vector<432x256xf32>, vector<8x256xf32> -> vector<8x256xf32>
    %c0_36 = arith.constant 0 : index
    %c0_37 = arith.constant 0 : index
    %53 = vector.load %arg9[%c0_36, %c0_37] : memref<8x1xf32, #tpu.memory_space<vmem>>, vector<8x1xf32>
    %54 = vector.broadcast %53 : vector<8x1xf32> to vector<8x256xf32>
    %55 = arith.addf %52, %54 : vector<8x256xf32>
    %cst_38 = arith.constant 0.000000e+00 : f32
    %56 = vector.broadcast %cst_38 : f32 to vector<8x256xf32>
    %57 = arith.maximumf %55, %56 : vector<8x256xf32>
    %c0_39 = arith.constant 0 : index
    %c0_40 = arith.constant 0 : index
    %58 = vector.load %arg10[%c0_39, %c0_40] : memref<5x8xf32, #tpu.memory_space<vmem>>, vector<5x8xf32>
    %cst_41 = arith.constant dense<0.000000e+00> : vector<5x256xf32>
    %59 = tpu.matmul %58, %57, %cst_41 {dimension_numbers = #tpu.dot_dimension_numbers<[1], [0], [0], [1], [0, 0, 1, 1], [], []>} : vector<5x8xf32>, vector<8x256xf32>, vector<5x256xf32> -> vector<5x256xf32>
    %c0_42 = arith.constant 0 : index
    %c0_43 = arith.constant 0 : index
    %60 = vector.load %arg7[%c0_42, %c0_43] : memref<256x144xf32, #tpu.memory_space<vmem>>, vector<256x144xf32>
    %cst_44 = arith.constant dense<0.000000e+00> : vector<5x144xf32>
    %61 = tpu.matmul %59, %60, %cst_44 {dimension_numbers = #tpu.dot_dimension_numbers<[1], [0], [0], [1], [0, 0, 1, 1], [], []>} : vector<5x256xf32>, vector<256x144xf32>, vector<5x144xf32> -> vector<5x144xf32>
    %c0_45 = arith.constant 0 : index
    %c0_46 = arith.constant 0 : index
    %62 = vector.load %arg11[%c0_45, %c0_46] : memref<5x1xf32, #tpu.memory_space<vmem>>, vector<5x1xf32>
    %63 = vector.broadcast %62 : vector<5x1xf32> to vector<5x144xf32>
    %64 = arith.addf %61, %63 : vector<5x144xf32>
    %c0_47 = arith.constant 0 : index
    %c0_48 = arith.constant 0 : index
    %c0_49 = arith.constant 0 : index
    %65 = vector.load %arg12[%c0_47, %c0_48, %c0_49] : memref<1x5x144xf32, #tpu.memory_space<vmem>>, vector<1x5x144xf32>
    %66 = vector.shape_cast %65 : vector<1x5x144xf32> to vector<5x144xf32>
    %67 = vector.shape_cast %64 : vector<5x144xf32> to vector<1x5x144xf32>
    tpu.vector_store %arg12[%c0_47, %c0_48, %c0_49], %67 {strides = array<i32>} : memref<1x5x144xf32, #tpu.memory_space<vmem>>, vector<1x5x144xf32>,
    return
  }
  func.func @transform_0(%arg0: i32) -> (i32, i32, i32) {
    %c0_i32 = arith.constant 0 : i32
    %c0_i32_0 = arith.constant 0 : i32
    %c0_i32_1 = arith.constant 0 : i32
    return %arg0, %c0_i32, %c0_i32_0 : i32, i32, i32
  }
  func.func @transform_1(%arg0: i32) -> (i32, i32) {
    %c0_i32 = arith.constant 0 : i32
    %c0_i32_0 = arith.constant 0 : i32
    %c0_i32_1 = arith.constant 0 : i32
    return %c0_i32, %c0_i32_0 : i32, i32
  }
  func.func @transform_2(%arg0: i32) -> (i32, i32) {
    %c0_i32 = arith.constant 0 : i32
    %c0_i32_0 = arith.constant 0 : i32
    %c0_i32_1 = arith.constant 0 : i32
    return %c0_i32, %c0_i32_0 : i32, i32
  }
  func.func @transform_3(%arg0: i32) -> (i32, i32) {
    %c0_i32 = arith.constant 0 : i32
    %c0_i32_0 = arith.constant 0 : i32
    %c0_i32_1 = arith.constant 0 : i32
    return %c0_i32, %c0_i32_0 : i32, i32
  }
  func.func @transform_4(%arg0: i32) -> (i32, i32) {
    %c0_i32 = arith.constant 0 : i32
    %c0_i32_0 = arith.constant 0 : i32
    %c0_i32_1 = arith.constant 0 : i32
    return %c0_i32, %c0_i32_0 : i32, i32
  }
  func.func @transform_5(%arg0: i32) -> (i32, i32) {
    %c0_i32 = arith.constant 0 : i32
    %c0_i32_0 = arith.constant 0 : i32
    %c0_i32_1 = arith.constant 0 : i32
    return %c0_i32, %c0_i32_0 : i32, i32
  }
  func.func @transform_6(%arg0: i32) -> (i32, i32) {
    %c0_i32 = arith.constant 0 : i32
    %c0_i32_0 = arith.constant 0 : i32
    %c0_i32_1 = arith.constant 0 : i32
    return %c0_i32, %c0_i32_0 : i32, i32
  }
  func.func @transform_7(%arg0: i32) -> (i32, i32) {
    %c0_i32 = arith.constant 0 : i32
    %c0_i32_0 = arith.constant 0 : i32
    %c0_i32_1 = arith.constant 0 : i32
    return %c0_i32, %c0_i32_0 : i32, i32
  }
  func.func @transform_8(%arg0: i32) -> (i32, i32) {
    %c0_i32 = arith.constant 0 : i32
    %c0_i32_0 = arith.constant 0 : i32
    %c0_i32_1 = arith.constant 0 : i32
    return %c0_i32, %c0_i32_0 : i32, i32
  }
  func.func @transform_9(%arg0: i32) -> (i32, i32) {
    %c0_i32 = arith.constant 0 : i32
    %c0_i32_0 = arith.constant 0 : i32
    %c0_i32_1 = arith.constant 0 : i32
    return %c0_i32, %c0_i32_0 : i32, i32
  }
  func.func @transform_10(%arg0: i32) -> (i32, i32) {
    %c0_i32 = arith.constant 0 : i32
    %c0_i32_0 = arith.constant 0 : i32
    %c0_i32_1 = arith.constant 0 : i32
    return %c0_i32, %c0_i32_0 : i32, i32
  }
  func.func @transform_11(%arg0: i32) -> (i32, i32, i32) {
    %c0_i32 = arith.constant 0 : i32
    %c0_i32_0 = arith.constant 0 : i32
    %c0_i32_1 = arith.constant 0 : i32
    return %arg0, %c0_i32, %c0_i32_0 : i32, i32, i32
  }
}

</mosaic_0001>

<llo_original>
// kernel: _lambda_.1
$region0: #{_lambda_.1}
  #allocation0 [shape = 'u32[]', space=smem, size = 0x4, offset = 0x4, fixed_abs, tag = 'smem constant byte address 0x4 - core index']
  #allocation1 [shape = 'u32[72,128]{1,0:T(1,128)}', space=vmem, size = 0x9000, scoped, tag = 'internal scratch']
  #allocation2 [shape = 'f32[48,256]{1,0:T(8,128)}', space=vmem, size = 0xc000, scoped, tag = 'scratch operand']
  #allocation3 [shape = 'f32[432,256]{1,0:T(8,128)}', space=vmem, size = 0x6c000, scoped, tag = 'scratch operand']
  %s0 = inlined_call_operand.vmem [shape: f32[2,16,144], index: 0, kind: input, shape index: {}]
  %s1 = inlined_call_operand.hbm [shape: f32[144,128], index: 1, kind: input, shape index: {}]
  %s2 = inlined_call_operand.hbm [shape: f32[32,16], index: 2, kind: input, shape index: {}]
  %s3 = inlined_call_operand.vmem [shape: f32[32,128], index: 3, kind: input, shape index: {}]
  %s4 = inlined_call_operand.hbm [shape: f32[128,256], index: 4, kind: input, shape index: {}]
  %s5 = inlined_call_operand.vmem [shape: f32[144,256], index: 5, kind: input, shape index: {}]
  %s6 = inlined_call_operand.hbm [shape: f32[256,144], index: 6, kind: input, shape index: {}]
  %s7 = inlined_call_operand.vmem [shape: f32[8,432], index: 7, kind: input, shape index: {}]
  %s8 = inlined_call_operand.hbm [shape: f32[8,1], index: 8, kind: input, shape index: {}]
  %s9 = inlined_call_operand.hbm [shape: f32[5,8], index: 9, kind: input, shape index: {}]
  %s10 = inlined_call_operand.hbm [shape: f32[5,1], index: 10, kind: input, shape index: {}]
  %s11 = inlined_call_operand.vmem [shape: f32[2,5,144], index: 11, kind: output, shape index: {}]
  %s12 = sld [smem:[#allocation0]]
  $region105: #{_lambda_.1} parent=0
    _
  %s14 = ssub.s32 1, %s12
  %s15 = scalar_select 0, %s14, %s12
  $region1: #{_lambda_.1} parent=0
    #allocation4 [shape = 'u8[73728]{0}', space=vmem, size = 0x12000, scoped, tag = 'input window, operand 1, single buffered']
    #allocation5 [shape = 's32[2]{0}', space=sflag, size = 0x8, scoped, tag = 'scoped memory for _lambda_.1']
    #allocation6 [shape = 'u8[16384]{0}', space=vmem, size = 0x4000, scoped, tag = 'input window, operand 2, single buffered']
    #allocation7 [shape = 's32[1]{0}', space=sflag, size = 0x4, scoped, tag = 'scoped memory for _lambda_.1']
    #allocation8 [shape = 'u8[131072]{0}', space=vmem, size = 0x20000, scoped, tag = 'input window, operand 4, single buffered']
    #allocation9 [shape = 'u8[262144]{0}', space=vmem, size = 0x40000, scoped, tag = 'input window, operand 6, single buffered']
    #allocation10 [shape = 's32[1]{0}', space=sflag, size = 0x4, scoped, tag = 'scoped memory for _lambda_.1']
    #allocation11 [shape = 'u8[4096]{0}', space=vmem, size = 0x1000, scoped, tag = 'input window, operand 8, single buffered']
    #allocation12 [shape = 'u8[4096]{0}', space=vmem, size = 0x1000, scoped, tag = 'input window, operand 9, single buffered']
    #allocation13 [shape = 's32[1]{0}', space=sflag, size = 0x4, scoped, tag = 'scoped memory for _lambda_.1']
    #allocation14 [shape = 'u8[4096]{0}', space=vmem, size = 0x1000, scoped, tag = 'input window, operand 10, single buffered']
    %16 = vsyncpa [#allocation5], 0
    %17 = vsyncpa [#allocation7], 0
    %18 = vsyncpa [#allocation10], 0
    %19 = vsyncpa [#allocation13], 0
    loop: start=0, step=1, limit=4
    $region2: #{_lambda_.1} parent=1 // loop_pre_header
      _
    $region3: #{_lambda_.1} parent=1 // loop_header
      %s21 = sphi 0, %s25
      %p22 = scmp.ge.s32.totalorder %s21, 4
      %s31 = sphi 0, %s33
      %s34 = sphi 0, %s31
      %s35 = sphi 0, %s34
      %s51 = sphi 0, %s35
      %s55 = sphi 0, %s55
      %s57 = sphi 0, %s55
      %s58 = sphi 0, %s57
      %s72 = sphi 0, %s58
      %s76 = sphi 0, %s76
      %s78 = sphi 0, %s76
      %s79 = sphi 0, %s78
      %s93 = sphi 0, %s79
      %s97 = sphi 0, %s97
      %s99 = sphi 0, %s97
      %s100 = sphi 0, %s99
      %s114 = sphi 0, %s100
      %s118 = sphi 0, %s118
      %s120 = sphi 0, %s118
      %s121 = sphi 0, %s120
      %s135 = sphi 0, %s121
      %s139 = sphi 0, %s139
      %s141 = sphi 0, %s139
      %s142 = sphi 0, %s141
      %s156 = sphi 0, %s142
      %s160 = sphi 0, %s160
      %s162 = sphi 0, %s160
      %s163 = sphi 0, %s162
      %s177 = sphi 0, %s163
      %s181 = sphi 0, %s181
      %s183 = sphi 0, %s181
      %s184 = sphi 0, %s183
      %s198 = sphi 0, %s184
      %s202 = sphi 0, %s202
      %s204 = sphi 0, %s202
      %s205 = sphi 0, %s204
      %s219 = sphi 0, %s205
      %s223 = sphi 0, %s223
      %s225 = sphi 0, %s223
      %s226 = sphi 0, %s225
      %s240 = sphi 0, %s226
      %s244 = sphi 0, %s244
      %s246 = sphi 0, %s244
      %s247 = sphi 0, %s246
      %s261 = sphi 0, %s247
      %s267 = sphi 0, %s269
      %s270 = sphi 0, %s267
      %s271 = sphi 0, %s270
      %s287 = sphi 0, %s271
    $region4: #{_lambda_.1} parent=1 // loop_header_branch
      %24 = sbr.rel (%p22) target = $region8
    $region5: #{_lambda_.1} parent=1 // loop_body
      %s26 = ssub.s32 %s21, 1
      %s27 = ssub.s32 %s21, 2
      %s28 = sadd.s32 %s21, 1
      %s29 = ssub.s32 %s21, %s28
      %p30 = scmp.eq.s32.totalorder %s29, 0
      %s32 = sadd.s32 %s31, 1
      %s33 = scalar_select %p30, %s31, %s32
      %p36 = pneg %p30
      %p37 = scmp.eq.s32.totalorder %s21, 1
      %p38 = por %p36, %p37
      %p39 = scmp.ne.s32.totalorder %s31, %s34
      %p40 = scmp.eq.s32.totalorder %s21, 0
      %p41 = por %p39, %p40
      %p42 = scmp.ne.s32.totalorder %s31, %s34
      %p43 = scmp.eq.s32.totalorder %s26, 1
      %p44 = por %p42, %p43
      %p45 = scmp.ne.s32.totalorder %s34, %s35
      %p46 = scmp.eq.s32.totalorder %s26, 0
      %p47 = por %p45, %p46
      %p48 = scmp.ne.s32.totalorder %s34, %s35
      %p49 = scmp.eq.s32.totalorder %s27, 1
      %p50 = por %p48, %p49
      %p52 = scmp.ne.s32.totalorder %s35, %s51
      %p53 = scmp.eq.s32.totalorder %s27, 0
      %p54 = por %p52, %p53
      %s56 = sadd.s32 %s55, 1
      %p59 = scmp.eq.s32.totalorder %s21, 1
      %p60 = scmp.ne.s32.totalorder %s55, %s57
      %p61 = scmp.eq.s32.totalorder %s21, 0
      %p62 = por %p60, %p61
      %p63 = scmp.ne.s32.totalorder %s55, %s57
      %p64 = scmp.eq.s32.totalorder %s26, 1
      %p65 = por %p63, %p64
      %p66 = scmp.ne.s32.totalorder %s57, %s58
      %p67 = scmp.eq.s32.totalorder %s26, 0
      %p68 = por %p66, %p67
      %p69 = scmp.ne.s32.totalorder %s57, %s58
      %p70 = scmp.eq.s32.totalorder %s27, 1
      %p71 = por %p69, %p70
      %p73 = scmp.ne.s32.totalorder %s58, %s72
      %p74 = scmp.eq.s32.totalorder %s27, 0
      %p75 = por %p73, %p74
      %s77 = sadd.s32 %s76, 1
      %p80 = scmp.eq.s32.totalorder %s21, 1
      %p81 = scmp.ne.s32.totalorder %s76, %s78
      %p82 = scmp.eq.s32.totalorder %s21, 0
      %p83 = por %p81, %p82
      %p84 = scmp.ne.s32.totalorder %s76, %s78
      %p85 = scmp.eq.s32.totalorder %s26, 1
      %p86 = por %p84, %p85
      %p87 = scmp.ne.s32.totalorder %s78, %s79
      %p88 = scmp.eq.s32.totalorder %s26, 0
      %p89 = por %p87, %p88
      %p90 = scmp.ne.s32.totalorder %s78, %s79
      %p91 = scmp.eq.s32.totalorder %s27, 1
      %p92 = por %p90, %p91
      %p94 = scmp.ne.s32.totalorder %s79, %s93
      %p95 = scmp.eq.s32.totalorder %s27, 0
      %p96 = por %p94, %p95
      %s98 = sadd.s32 %s97, 1
      %p101 = scmp.eq.s32.totalorder %s21, 1
      %p102 = scmp.ne.s32.totalorder %s97, %s99
      %p103 = scmp.eq.s32.totalorder %s21, 0
      %p104 = por %p102, %p103
      %p105 = scmp.ne.s32.totalorder %s97, %s99
      %p106 = scmp.eq.s32.totalorder %s26, 1
      %p107 = por %p105, %p106
      %p108 = scmp.ne.s32.totalorder %s99, %s100
      %p109 = scmp.eq.s32.totalorder %s26, 0
      %p110 = por %p108, %p109
      %p111 = scmp.ne.s32.totalorder %s99, %s100
      %p112 = scmp.eq.s32.totalorder %s27, 1
      %p113 = por %p111, %p112
      %p115 = scmp.ne.s32.totalorder %s100, %s114
      %p116 = scmp.eq.s32.totalorder %s27, 0
      %p117 = por %p115, %p116
      %s119 = sadd.s32 %s118, 1
      %p122 = scmp.eq.s32.totalorder %s21, 1
      %p123 = scmp.ne.s32.totalorder %s118, %s120
      %p124 = scmp.eq.s32.totalorder %s21, 0
      %p125 = por %p123, %p124
      %p126 = scmp.ne.s32.totalorder %s118, %s120
      %p127 = scmp.eq.s32.totalorder %s26, 1
      %p128 = por %p126, %p127
      %p129 = scmp.ne.s32.totalorder %s120, %s121
      %p130 = scmp.eq.s32.totalorder %s26, 0
      %p131 = por %p129, %p130
      %p132 = scmp.ne.s32.totalorder %s120, %s121
      %p133 = scmp.eq.s32.totalorder %s27, 1
      %p134 = por %p132, %p133
      %p136 = scmp.ne.s32.totalorder %s121, %s135
      %p137 = scmp.eq.s32.totalorder %s27, 0
      %p138 = por %p136, %p137
      %s140 = sadd.s32 %s139, 1
      %p143 = scmp.eq.s32.totalorder %s21, 1
      %p144 = scmp.ne.s32.totalorder %s139, %s141
      %p145 = scmp.eq.s32.totalorder %s21, 0
      %p146 = por %p144, %p145
      %p147 = scmp.ne.s32.totalorder %s139, %s141
      %p148 = scmp.eq.s32.totalorder %s26, 1
      %p149 = por %p147, %p148
      %p150 = scmp.ne.s32.totalorder %s141, %s142
      %p151 = scmp.eq.s32.totalorder %s26, 0
      %p152 = por %p150, %p151
      %p153 = scmp.ne.s32.totalorder %s141, %s142
      %p154 = scmp.eq.s32.totalorder %s27, 1
      %p155 = por %p153, %p154
      %p157 = scmp.ne.s32.totalorder %s142, %s156
      %p158 = scmp.eq.s32.totalorder %s27, 0
      %p159 = por %p157, %p158
      %s161 = sadd.s32 %s160, 1
      %p164 = scmp.eq.s32.totalorder %s21, 1
      %p165 = scmp.ne.s32.totalorder %s160, %s162
      %p166 = scmp.eq.s32.totalorder %s21, 0
      %p167 = por %p165, %p166
      %p168 = scmp.ne.s32.totalorder %s160, %s162
      %p169 = scmp.eq.s32.totalorder %s26, 1
      %p170 = por %p168, %p169
      %p171 = scmp.ne.s32.totalorder %s162, %s163
      %p172 = scmp.eq.s32.totalorder %s26, 0
      %p173 = por %p171, %p172
      %p174 = scmp.ne.s32.totalorder %s162, %s163
      %p175 = scmp.eq.s32.totalorder %s27, 1
      %p176 = por %p174, %p175
      %p178 = scmp.ne.s32.totalorder %s163, %s177
      %p179 = scmp.eq.s32.totalorder %s27, 0
      %p180 = por %p178, %p179
      %s182 = sadd.s32 %s181, 1
      %p185 = scmp.eq.s32.totalorder %s21, 1
      %p186 = scmp.ne.s32.totalorder %s181, %s183
      %p187 = scmp.eq.s32.totalorder %s21, 0
      %p188 = por %p186, %p187
      %p189 = scmp.ne.s32.totalorder %s181, %s183
      %p190 = scmp.eq.s32.totalorder %s26, 1
      %p191 = por %p189, %p190
      %p192 = scmp.ne.s32.totalorder %s183, %s184
      %p193 = scmp.eq.s32.totalorder %s26, 0
      %p194 = por %p192, %p193
      %p195 = scmp.ne.s32.totalorder %s183, %s184
      %p196 = scmp.eq.s32.totalorder %s27, 1
      %p197 = por %p195, %p196
      %p199 = scmp.ne.s32.totalorder %s184, %s198
      %p200 = scmp.eq.s32.totalorder %s27, 0
      %p201 = por %p199, %p200
      %s203 = sadd.s32 %s202, 1
      %p206 = scmp.eq.s32.totalorder %s21, 1
      %p207 = scmp.ne.s32.totalorder %s202, %s204
      %p208 = scmp.eq.s32.totalorder %s21, 0
      %p209 = por %p207, %p208
      %p210 = scmp.ne.s32.totalorder %s202, %s204
      %p211 = scmp.eq.s32.totalorder %s26, 1
      %p212 = por %p210, %p211
      %p213 = scmp.ne.s32.totalorder %s204, %s205
      %p214 = scmp.eq.s32.totalorder %s26, 0
      %p215 = por %p213, %p214
      %p216 = scmp.ne.s32.totalorder %s204, %s205
      %p217 = scmp.eq.s32.totalorder %s27, 1
      %p218 = por %p216, %p217
      %p220 = scmp.ne.s32.totalorder %s205, %s219
      %p221 = scmp.eq.s32.totalorder %s27, 0
      %p222 = por %p220, %p221
      %s224 = sadd.s32 %s223, 1
      %p227 = scmp.eq.s32.totalorder %s21, 1
      %p228 = scmp.ne.s32.totalorder %s223, %s225
      %p229 = scmp.eq.s32.totalorder %s21, 0
      %p230 = por %p228, %p229
      %p231 = scmp.ne.s32.totalorder %s223, %s225
      %p232 = scmp.eq.s32.totalorder %s26, 1
      %p233 = por %p231, %p232
      %p234 = scmp.ne.s32.totalorder %s225, %s226
      %p235 = scmp.eq.s32.totalorder %s26, 0
      %p236 = por %p234, %p235
      %p237 = scmp.ne.s32.totalorder %s225, %s226
      %p238 = scmp.eq.s32.totalorder %s27, 1
      %p239 = por %p237, %p238
      %p241 = scmp.ne.s32.totalorder %s226, %s240
      %p242 = scmp.eq.s32.totalorder %s27, 0
      %p243 = por %p241, %p242
      %s245 = sadd.s32 %s244, 1
      %p248 = scmp.eq.s32.totalorder %s21, 1
      %p249 = scmp.ne.s32.totalorder %s244, %s246
      %p250 = scmp.eq.s32.totalorder %s21, 0
      %p251 = por %p249, %p250
      %p252 = scmp.ne.s32.totalorder %s244, %s246
      %p253 = scmp.eq.s32.totalorder %s26, 1
      %p254 = por %p252, %p253
      %p255 = scmp.ne.s32.totalorder %s246, %s247
      %p256 = scmp.eq.s32.totalorder %s26, 0
      %p257 = por %p255, %p256
      %p258 = scmp.ne.s32.totalorder %s246, %s247
      %p259 = scmp.eq.s32.totalorder %s27, 1
      %p260 = por %p258, %p259
      %p262 = scmp.ne.s32.totalorder %s247, %s261
      %p263 = scmp.eq.s32.totalorder %s27, 0
      %p264 = por %p262, %p263
      %s265 = ssub.s32 %s21, %s28
      %p266 = scmp.eq.s32.totalorder %s265, 0
      %s268 = sadd.s32 %s267, 1
      %s269 = scalar_select %p266, %s267, %s268
      %p272 = pneg %p266
      %p273 = scmp.eq.s32.totalorder %s21, 1
      %p274 = por %p272, %p273
      %p275 = scmp.ne.s32.totalorder %s267, %s270
      %p276 = scmp.eq.s32.totalorder %s21, 0
      %p277 = por %p275, %p276
      %p278 = scmp.ne.s32.totalorder %s267, %s270
      %p279 = scmp.eq.s32.totalorder %s26, 1
      %p280 = por %p278, %p279
      %p281 = scmp.ne.s32.totalorder %s270, %s271
      %p282 = scmp.eq.s32.totalorder %s26, 0
      %p283 = por %p281, %p282
      %p284 = scmp.ne.s32.totalorder %s270, %s271
      %p285 = scmp.eq.s32.totalorder %s27, 1
      %p286 = por %p284, %p285
      %p288 = scmp.ne.s32.totalorder %s271, %s287
      %p289 = scmp.eq.s32.totalorder %s27, 0
      %p290 = por %p288, %p289
      %p291 = scmp.le.s32.totalorder 1, %s21
      %p292 = scmp.lt.s32.totalorder %s21, 3
      %p293 = pnand %p291, %p292
      %p294 = pneg %p293
      // Predicated region
      $region9: #{_lambda_.1} parent=5 // pred_check
        _
      $region10: #{_lambda_.1} parent=5 // pred_check_branch
        %296 = sbr.rel (%p293) target = $region12
      $region11: #{_lambda_.1} parent=5 // pred_region
        %s297 = ssub.s32 %s21, 1
        // Predicated region
        $region13: #{_lambda_.1} parent=11 // pred_check
          %p298 = pneg %p68
        $region14: #{_lambda_.1} parent=11 // pred_check_branch
          %300 = sbr.rel (%p298) target = $region16
        $region15: #{_lambda_.1} parent=11 // pred_region
          %302 = vsyncadd [#allocation5], 0
          %s303 = sshll.u32 %s1, 4
          %s304 = int_to_ptr.hbm [resolvable:$true] %s303
          %s305 = sshll.u32 [#allocation4], 4
          %s306 = int_to_ptr.vmem [resolvable:$true] %s305
          %311 = dma.hbm_to_vmem [thread:$0]  %s304, 2304, %s306, [#allocation5], 128, 128, 8
        $region16: #{_lambda_.1} parent=11 // pred_fallthru
          _
        // Predicated region
        $region17: #{_lambda_.1} parent=11 // pred_check
          %p312 = pneg %p89
        $region18: #{_lambda_.1} parent=11 // pred_check_branch
          %314 = sbr.rel (%p312) target = $region20
        $region19: #{_lambda_.1} parent=11 // pred_region
          %316 = vsyncadd [#allocation7], 0
          %s317 = sshll.u32 %s2, 4
          %s318 = int_to_ptr.hbm [resolvable:$true] %s317
          %s319 = sshll.u32 [#allocation6], 4
          %s320 = int_to_ptr.vmem [resolvable:$true] %s319
          %325 = dma.hbm_to_vmem [thread:$0]  %s318, 512, %s320, [#allocation7], 128, 128, 8
        $region20: #{_lambda_.1} parent=11 // pred_fallthru
          _
        // Predicated region
        $region21: #{_lambda_.1} parent=11 // pred_check
          %p326 = pneg %p110
        $region22: #{_lambda_.1} parent=11 // pred_check_branch
          %328 = sbr.rel (%p326) target = $region24
        $region23: #{_lambda_.1} parent=11 // pred_region
          _
        $region24: #{_lambda_.1} parent=11 // pred_fallthru
          _
        // Predicated region
        $region25: #{_lambda_.1} parent=11 // pred_check
          %p329 = pneg %p131
        $region26: #{_lambda_.1} parent=11 // pred_check_branch
          %331 = sbr.rel (%p329) target = $region28
        $region27: #{_lambda_.1} parent=11 // pred_region
          %333 = vsyncadd [#allocation7], 0
          %s334 = sshll.u32 %s4, 4
          %s335 = int_to_ptr.hbm [resolvable:$true] %s334
          %s336 = sshll.u32 [#allocation8], 4
          %s337 = int_to_ptr.vmem [resolvable:$true] %s336
          %342 = dma.hbm_to_vmem [thread:$0]  %s335, 4096, %s337, [#allocation7], 256, 256, 16
        $region28: #{_lambda_.1} parent=11 // pred_fallthru
          _
        // Predicated region
        $region29: #{_lambda_.1} parent=11 // pred_check
          %p343 = pneg %p152
        $region30: #{_lambda_.1} parent=11 // pred_check_branch
          %345 = sbr.rel (%p343) target = $region32
        $region31: #{_lambda_.1} parent=11 // pred_region
          _
        $region32: #{_lambda_.1} parent=11 // pred_fallthru
          _
        // Predicated region
        $region33: #{_lambda_.1} parent=11 // pred_check
          %p346 = pneg %p173
        $region34: #{_lambda_.1} parent=11 // pred_check_branch
          %348 = sbr.rel (%p346) target = $region36
        $region35: #{_lambda_.1} parent=11 // pred_region
          %350 = vsyncadd [#allocation10], 0
          %s351 = sshll.u32 %s6, 4
          %s352 = int_to_ptr.hbm [resolvable:$true] %s351
          %s353 = sshll.u32 [#allocation9], 4
          %s354 = int_to_ptr.vmem [resolvable:$true] %s353
          %359 = dma.hbm_to_vmem [thread:$0]  %s352, 8192, %s354, [#allocation10], 256, 256, 16
        $region36: #{_lambda_.1} parent=11 // pred_fallthru
          _
        // Predicated region
        $region37: #{_lambda_.1} parent=11 // pred_check
          %p360 = pneg %p194
        $region38: #{_lambda_.1} parent=11 // pred_check_branch
          %362 = sbr.rel (%p360) target = $region40
        $region39: #{_lambda_.1} parent=11 // pred_region
          _
        $region40: #{_lambda_.1} parent=11 // pred_fallthru
          _
        // Predicated region
        $region41: #{_lambda_.1} parent=11 // pred_check
          %p363 = pneg %p215
        $region42: #{_lambda_.1} parent=11 // pred_check_branch
          %365 = sbr.rel (%p363) target = $region44
        $region43: #{_lambda_.1} parent=11 // pred_region
          %367 = vsyncadd [#allocation10], 0
          %s369 = sshll.u32 %s8, 4
          %s370 = int_to_ptr.hbm [resolvable:$true] %s369
          %s371 = sshll.u32 [#allocation11], 4
          %s372 = int_to_ptr.vmem [resolvable:$true] %s371
          %374 = dma.hbm_to_vmem [thread:$0]  %s370, 128, %s372, [#allocation10]
        $region44: #{_lambda_.1} parent=11 // pred_fallthru
          _
        // Predicated region
        $region45: #{_lambda_.1} parent=11 // pred_check
          %p375 = pneg %p236
        $region46: #{_lambda_.1} parent=11 // pred_check_branch
          %377 = sbr.rel (%p375) target = $region48
        $region47: #{_lambda_.1} parent=11 // pred_region
          %379 = vsyncadd [#allocation13], 0
          %s381 = sshll.u32 %s9, 4
          %s382 = int_to_ptr.hbm [resolvable:$true] %s381
          %s383 = sshll.u32 [#allocation12], 4
          %s384 = int_to_ptr.vmem [resolvable:$true] %s383
          %386 = dma.hbm_to_vmem [thread:$0]  %s382, 128, %s384, [#allocation13]
        $region48: #{_lambda_.1} parent=11 // pred_fallthru
          _
        // Predicated region
        $region49: #{_lambda_.1} parent=11 // pred_check
          %p387 = pneg %p257
        $region50: #{_lambda_.1} parent=11 // pred_check_branch
          %389 = sbr.rel (%p387) target = $region52
        $region51: #{_lambda_.1} parent=11 // pred_region
          %391 = vsyncadd [#allocation13], 0
          %s393 = sshll.u32 %s10, 4
          %s394 = int_to_ptr.hbm [resolvable:$true] %s393
          %s395 = sshll.u32 [#allocation14], 4
          %s396 = int_to_ptr.vmem [resolvable:$true] %s395
          %398 = dma.hbm_to_vmem [thread:$0]  %s394, 128, %s396, [#allocation13]
        $region52: #{_lambda_.1} parent=11 // pred_fallthru
          _
      $region12: #{_lambda_.1} parent=5 // pred_fallthru
        _
      %p399 = scmp.lt.s32.totalorder %s21, 2
      // Predicated region
      $region53: #{_lambda_.1} parent=5 // pred_check
        %p400 = pneg %p399
      $region54: #{_lambda_.1} parent=5 // pred_check_branch
        %402 = sbr.rel (%p400) target = $region56
      $region55: #{_lambda_.1} parent=5 // pred_region
        // Predicated region
        $region57: #{_lambda_.1} parent=55 // pred_check
          %p403 = pneg %p41
        $region58: #{_lambda_.1} parent=55 // pred_check_branch
          %405 = sbr.rel (%p403) target = $region60
        $region59: #{_lambda_.1} parent=55 // pred_region
          %p406 = scmp.lt.s32.totalorder %s21, 1
          %s407 = scalar_select %p406, %s21, 1
          %s408 = smul.addr %s407, 4
          %s409 = smul.addr %s408, 8
          %s410 = scalar_lea.vmem %s0, %s409
        $region60: #{_lambda_.1} parent=55 // pred_fallthru
          _
      $region56: #{_lambda_.1} parent=5 // pred_fallthru
        _
      %p411 = scmp.le.s32.totalorder 1, %s21
      %p412 = scmp.lt.s32.totalorder %s21, 3
      %p413 = pnand %p411, %p412
      %p414 = pneg %p413
      // Predicated region
      $region61: #{_lambda_.1} parent=5 // pred_check
        _
      $region62: #{_lambda_.1} parent=5 // pred_check_branch
        %416 = sbr.rel (%p413) target = $region64
      $region63: #{_lambda_.1} parent=5 // pred_region
        %s417 = ssub.s32 %s21, 1
        // Predicated region
        $region65: #{_lambda_.1} parent=63 // pred_check
          %p418 = pneg %p68
        $region66: #{_lambda_.1} parent=63 // pred_check_branch
          %420 = sbr.rel (%p418) target = $region68
        $region67: #{_lambda_.1} parent=63 // pred_region
          %422 = dma.done [#allocation5], 2304
        $region68: #{_lambda_.1} parent=63 // pred_fallthru
          _
        // Predicated region
        $region69: #{_lambda_.1} parent=63 // pred_check
          %p423 = pneg %p89
        $region70: #{_lambda_.1} parent=63 // pred_check_branch
          %425 = sbr.rel (%p423) target = $region72
        $region71: #{_lambda_.1} parent=63 // pred_region
          %427 = dma.done [#allocation7], 512
        $region72: #{_lambda_.1} parent=63 // pred_fallthru
          _
        // Predicated region
        $region73: #{_lambda_.1} parent=63 // pred_check
          %p428 = pneg %p131
        $region74: #{_lambda_.1} parent=63 // pred_check_branch
          %430 = sbr.rel (%p428) target = $region76
        $region75: #{_lambda_.1} parent=63 // pred_region
          %432 = dma.done [#allocation7], 4096
        $region76: #{_lambda_.1} parent=63 // pred_fallthru
          _
        // Predicated region
        $region77: #{_lambda_.1} parent=63 // pred_check
          %p433 = pneg %p173
        $region78: #{_lambda_.1} parent=63 // pred_check_branch
          %435 = sbr.rel (%p433) target = $region80
        $region79: #{_lambda_.1} parent=63 // pred_region
          %437 = dma.done [#allocation10], 8192
        $region80: #{_lambda_.1} parent=63 // pred_fallthru
          _
        // Predicated region
        $region81: #{_lambda_.1} parent=63 // pred_check
          %p438 = pneg %p215
        $region82: #{_lambda_.1} parent=63 // pred_check_branch
          %440 = sbr.rel (%p438) target = $region84
        $region83: #{_lambda_.1} parent=63 // pred_region
          %442 = dma.done [#allocation10], 128
        $region84: #{_lambda_.1} parent=63 // pred_fallthru
          _
        // Predicated region
        $region85: #{_lambda_.1} parent=63 // pred_check
          %p443 = pneg %p236
        $region86: #{_lambda_.1} parent=63 // pred_check_branch
          %445 = sbr.rel (%p443) target = $region88
        $region87: #{_lambda_.1} parent=63 // pred_region
          %447 = dma.done [#allocation13], 128
        $region88: #{_lambda_.1} parent=63 // pred_fallthru
          _
        // Predicated region
        $region89: #{_lambda_.1} parent=63 // pred_check
          %p448 = pneg %p257
        $region90: #{_lambda_.1} parent=63 // pred_check_branch
          %450 = sbr.rel (%p448) target = $region92
        $region91: #{_lambda_.1} parent=63 // pred_region
          %452 = dma.done [#allocation13], 128
        $region92: #{_lambda_.1} parent=63 // pred_fallthru
          _
        %p453 = scmp.lt.s32.totalorder %s26, 1
        %s454 = scalar_select %p453, %s26, 1
        %s455 = smul.addr %s454, 4
        %s456 = smul.addr %s455, 8
        %s457 = scalar_lea.vmem %s0, %s456
        %p458 = pneg %p47
        %p459 = pneg %p44
        %p460 = pneg %p68
        %p461 = pneg %p65
        %p462 = pneg %p89
        %p463 = pneg %p86
        %p464 = pneg %p110
        %p465 = pneg %p107
        %p466 = pneg %p131
        %p467 = pneg %p128
        %p468 = pneg %p152
        %p469 = pneg %p149
        %p470 = pneg %p173
        %p471 = pneg %p170
        %p472 = pneg %p194
        %p473 = pneg %p191
        %p474 = pneg %p215
        %p475 = pneg %p212
        %p476 = pneg %p236
        %p477 = pneg %p233
        %p478 = pneg %p257
        %p479 = pneg %p254
        %p480 = pneg %p283
        %p481 = pneg %p280
        %p482 = scmp.lt.s32.totalorder %s26, 1
        %s483 = scalar_select %p482, %s26, 1
        %s484 = smul.addr %s483, 2
        %s485 = smul.addr %s484, 8
        %s486 = scalar_lea.vmem %s11, %s485
        %p487 = scmp.lt.s32.totalorder %s26, 1
        %s488 = scalar_select %p487, %s26, 1
        %s489 = smul.addr %s488, 4
        %s490 = smul.addr %s489, 8
        %s491 = scalar_lea.vmem %s0, %s490
        %p492 = scmp.lt.s32.totalorder %s26, 1
        %s493 = scalar_select %p492, %s26, 1
        %s494 = smul.addr %s493, 2
        %s495 = smul.addr %s494, 8
        %s496 = scalar_lea.vmem %s11, %s495
        %v497 = vld [vmem:[%s491] sm:$0xff]
        %v498 = vld [vmem:[%s491 + $0x8] sm:$0xff]
        %v499 = vld [vmem:[%s491 + $0x10] sm:$0xff]
        %v500 = vld [vmem:[%s491 + $0x18] sm:$0xff]
        %v501 = vld [vmem:[#allocation4] sm:$0xff]
        %v502 = vld [vmem:[#allocation4 + $0x8] sm:$0xff]
        %v503 = vld [vmem:[#allocation4 + $0x10] sm:$0xff]
        %v504 = vld [vmem:[#allocation4 + $0x18] sm:$0xff]
        %v505 = vld [vmem:[#allocation4 + $0x20] sm:$0xff]
        %v506 = vld [vmem:[#allocation4 + $0x28] sm:$0xff]
        %v507 = vld [vmem:[#allocation4 + $0x30] sm:$0xff]
        %v508 = vld [vmem:[#allocation4 + $0x38] sm:$0xff]
        %v509 = vld [vmem:[#allocation4 + $0x40] sm:$0xff]
        %v510 = vld [vmem:[#allocation4 + $0x48] sm:$0xff]
        %v511 = vld [vmem:[#allocation4 + $0x50] sm:$0xff]
        %v512 = vld [vmem:[#allocation4 + $0x58] sm:$0xff]
        %v513 = vld [vmem:[#allocation4 + $0x60] sm:$0xff]
        %v514 = vld [vmem:[#allocation4 + $0x68] sm:$0xff]
        %v515 = vld [vmem:[#allocation4 + $0x70] sm:$0xff]
        %v516 = vld [vmem:[#allocation4 + $0x78] sm:$0xff]
        %v517 = vld [vmem:[#allocation4 + $0x80] sm:$0xff]
        %v518 = vld [vmem:[#allocation4 + $0x88] sm:$0xff]
        %vm519 = vcmask 130048
        %v521 = vsel %vm519, %v498, 0
        %v524 = vsel %vm519, %v500, 0
        %526 = vmatpush.msra.mxu0 %v516
        %527 = vmatpush.msra.mxu0 %v515
        %528 = vmatpush.msra.mxu0 %v514
        %529 = vmatpush.msra.mxu0 %v513
        %530 = vmatpush.msra.mxu0 %v512
        %531 = vmatpush.msra.mxu0 %v511
        %532 = vmatpush.msra.mxu0 %v510
        %533 = vmatpush.msra.mxu0 %v509
        %534 = vmatpush.msra.mxu0 %v508
        %535 = vmatpush.msra.mxu0 %v507
        %536 = vmatpush.msra.mxu0 %v506
        %537 = vmatpush.msra.mxu0 %v505
        %538 = vmatpush.msra.mxu0 %v504
        %539 = vmatpush.msra.mxu0 %v503
        %540 = vmatpush.msra.mxu0 %v502
        %541 = vmatpush.msra.mxu0 %v501
        %542 = vmatmul.f32.gmra.mxu0 %v497
        %v543 = vpop.f32.mrf.mxu0
        %v544 = vadd.f32 0.0, %v543
        %545 = vmatmul.f32.gmra.mxu0 %v499
        %v546 = vpop.f32.mrf.mxu0
        %v547 = vadd.f32 0.0, %v546
        %548 = vdwg.mxu0
        %549 = vmatpush.msra.mxu0 0.0
        %550 = vmatpush.msra.mxu0 0.0
        %551 = vmatpush.msra.mxu0 0.0
        %552 = vmatpush.msra.mxu0 0.0
        %553 = vmatpush.msra.mxu0 0.0
        %554 = vmatpush.msra.mxu0 0.0
        %555 = vmatpush.msra.mxu0 0.0
        %556 = vmatpush.msra.mxu0 0.0
        %557 = vmatpush.msra.mxu0 0.0
        %558 = vmatpush.msra.mxu0 0.0
        %559 = vmatpush.msra.mxu0 0.0
        %560 = vmatpush.msra.mxu0 0.0
        %561 = vmatpush.msra.mxu0 0.0
        %562 = vmatpush.msra.mxu0 0.0
        %563 = vmatpush.msra.mxu0 %v518
        %564 = vmatpush.msra.mxu0 %v517
        %565 = vmatmul.f32.gmra.mxu0 %v521
        %v566 = vpop.f32.mrf.mxu0
        %v567 = vadd.f32 %v544, %v566
        %568 = vmatmul.f32.gmra.mxu0 %v524
        %v569 = vpop.f32.mrf.mxu0
        %v570 = vadd.f32 %v547, %v569
        %571 = vdwg.mxu0
        %v572 = vld [vmem:[#allocation6] sm:$0xff]
        %v573 = vld [vmem:[#allocation6 + $0x8] sm:$0xff]
        %v574 = vld [vmem:[#allocation6 + $0x10] sm:$0xff]
        %v575 = vld [vmem:[#allocation6 + $0x18] sm:$0xff]
        %v576 = vld [vmem:[%s3] sm:$0xff]
        %v577 = vld [vmem:[%s3 + $0x8] sm:$0xff]
        %v578 = vld [vmem:[%s3 + $0x10] sm:$0xff]
        %v579 = vld [vmem:[%s3 + $0x18] sm:$0xff]
        %v581 = vsel %vm519, %v572, 0
        %v584 = vsel %vm519, %v573, 0
        %v587 = vsel %vm519, %v574, 0
        %v590 = vsel %vm519, %v575, 0
        %592 = vmatpush.msra.mxu0 0.0
        %593 = vmatpush.msra.mxu0 0.0
        %594 = vmatpush.msra.mxu0 0.0
        %595 = vmatpush.msra.mxu0 0.0
        %596 = vmatpush.msra.mxu0 0.0
        %597 = vmatpush.msra.mxu0 0.0
        %598 = vmatpush.msra.mxu0 0.0
        %599 = vmatpush.msra.mxu0 0.0
        %600 = vmatpush.msra.mxu0 0.0
        %601 = vmatpush.msra.mxu0 0.0
        %602 = vmatpush.msra.mxu0 0.0
        %603 = vmatpush.msra.mxu0 0.0
        %604 = vmatpush.msra.mxu0 0.0
        %605 = vmatpush.msra.mxu0 0.0
        %606 = vmatpush.msra.mxu0 %v570
        %607 = vmatpush.msra.mxu0 %v567
        %608 = vmatmul.f32.gmra.mxu0 %v581
        %v609 = vpop.f32.mrf.mxu0
        %v610 = vadd.f32 %v576, %v609
        %611 = vmatmul.f32.gmra.mxu0 %v584
        %v612 = vpop.f32.mrf.mxu0
        %v613 = vadd.f32 %v577, %v612
        %614 = vmatmul.f32.gmra.mxu0 %v587
        %v615 = vpop.f32.mrf.mxu0
        %v616 = vadd.f32 %v578, %v615
        %617 = vmatmul.f32.gmra.mxu0 %v590
        %v618 = vpop.f32.mrf.mxu0
        %v619 = vadd.f32 %v579, %v618
        %620 = vdwg.mxu0
        %v621 = vmax.f32 %v610, 0.0
        %v622 = vmax.f32 %v613, 0.0
        %v623 = vmax.f32 %v616, 0.0
        %v624 = vmax.f32 %v619, 0.0
        %v625 = vld [vmem:[#allocation8] sm:$0xff]
        %v626 = vld [vmem:[#allocation8 + $0x8] sm:$0xff]
        %v627 = vld [vmem:[#allocation8 + $0x10] sm:$0xff]
        %v628 = vld [vmem:[#allocation8 + $0x18] sm:$0xff]
        %v629 = vld [vmem:[#allocation8 + $0x20] sm:$0xff]
        %v630 = vld [vmem:[#allocation8 + $0x28] sm:$0xff]
        %v631 = vld [vmem:[#allocation8 + $0x30] sm:$0xff]
        %v632 = vld [vmem:[#allocation8 + $0x38] sm:$0xff]
        %v633 = vld [vmem:[#allocation8 + $0x40] sm:$0xff]
        %v634 = vld [vmem:[#allocation8 + $0x48] sm:$0xff]
        %v635 = vld [vmem:[#allocation8 + $0x50] sm:$0xff]
        %v636 = vld [vmem:[#allocation8 + $0x58] sm:$0xff]
        %v637 = vld [vmem:[#allocation8 + $0x60] sm:$0xff]
        %v638 = vld [vmem:[#allocation8 + $0x68] sm:$0xff]
        %v639 = vld [vmem:[#allocation8 + $0x70] sm:$0xff]
        %v640 = vld [vmem:[#allocation8 + $0x78] sm:$0xff]
        %v641 = vld [vmem:[#allocation8 + $0x80] sm:$0xff]
        %v642 = vld [vmem:[#allocation8 + $0x88] sm:$0xff]
        %v643 = vld [vmem:[#allocation8 + $0x90] sm:$0xff]
        %v644 = vld [vmem:[#allocation8 + $0x98] sm:$0xff]
        %v645 = vld [vmem:[#allocation8 + $0xa0] sm:$0xff]
        %v646 = vld [vmem:[#allocation8 + $0xa8] sm:$0xff]
        %v647 = vld [vmem:[#allocation8 + $0xb0] sm:$0xff]
        %v648 = vld [vmem:[#allocation8 + $0xb8] sm:$0xff]
        %v649 = vld [vmem:[#allocation8 + $0xc0] sm:$0xff]
        %v650 = vld [vmem:[#allocation8 + $0xc8] sm:$0xff]
        %v651 = vld [vmem:[#allocation8 + $0xd0] sm:$0xff]
        %v652 = vld [vmem:[#allocation8 + $0xd8] sm:$0xff]
        %v653 = vld [vmem:[#allocation8 + $0xe0] sm:$0xff]
        %v654 = vld [vmem:[#allocation8 + $0xe8] sm:$0xff]
        %v655 = vld [vmem:[#allocation8 + $0xf0] sm:$0xff]
        %v656 = vld [vmem:[#allocation8 + $0xf8] sm:$0xff]
        %657 = vmatpush.msra.mxu0 %v655
        %658 = vmatpush.msra.mxu0 %v653
        %659 = vmatpush.msra.mxu0 %v651
        %660 = vmatpush.msra.mxu0 %v649
        %661 = vmatpush.msra.mxu0 %v647
        %662 = vmatpush.msra.mxu0 %v645
        %663 = vmatpush.msra.mxu0 %v643
        %664 = vmatpush.msra.mxu0 %v641
        %665 = vmatpush.msra.mxu0 %v639
        %666 = vmatpush.msra.mxu0 %v637
        %667 = vmatpush.msra.mxu0 %v635
        %668 = vmatpush.msra.mxu0 %v633
        %669 = vmatpush.msra.mxu0 %v631
        %670 = vmatpush.msra.mxu0 %v629
        %671 = vmatpush.msra.mxu0 %v627
        %672 = vmatpush.msra.mxu0 %v625
        %673 = vmatmul.f32.gmra.mxu0 %v621
        %v674 = vpop.f32.mrf.mxu0
        %v675 = vadd.f32 0.0, %v674
        %676 = vmatmul.f32.gmra.mxu0 %v622
        %v677 = vpop.f32.mrf.mxu0
        %v678 = vadd.f32 0.0, %v677
        %679 = vmatmul.f32.gmra.mxu0 %v623
        %v680 = vpop.f32.mrf.mxu0
        %v681 = vadd.f32 0.0, %v680
        %682 = vmatmul.f32.gmra.mxu0 %v624
        %v683 = vpop.f32.mrf.mxu0
        %v684 = vadd.f32 0.0, %v683
        %685 = vdwg.mxu0
        %686 = vmatpush.msra.mxu0 %v656
        %687 = vmatpush.msra.mxu0 %v654
        %688 = vmatpush.msra.mxu0 %v652
        %689 = vmatpush.msra.mxu0 %v650
        %690 = vmatpush.msra.mxu0 %v648
        %691 = vmatpush.msra.mxu0 %v646
        %692 = vmatpush.msra.mxu0 %v644
        %693 = vmatpush.msra.mxu0 %v642
        %694 = vmatpush.msra.mxu0 %v640
        %695 = vmatpush.msra.mxu0 %v638
        %696 = vmatpush.msra.mxu0 %v636
        %697 = vmatpush.msra.mxu0 %v634
        %698 = vmatpush.msra.mxu0 %v632
        %699 = vmatpush.msra.mxu0 %v630
        %700 = vmatpush.msra.mxu0 %v628
        %701 = vmatpush.msra.mxu0 %v626
        %702 = vmatmul.f32.gmra.mxu0 %v621
        %v703 = vpop.f32.mrf.mxu0
        %v704 = vadd.f32 0.0, %v703
        %705 = vmatmul.f32.gmra.mxu0 %v622
        %v706 = vpop.f32.mrf.mxu0
        %v707 = vadd.f32 0.0, %v706
        %708 = vmatmul.f32.gmra.mxu0 %v623
        %v709 = vpop.f32.mrf.mxu0
        %v710 = vadd.f32 0.0, %v709
        %711 = vmatmul.f32.gmra.mxu0 %v624
        %v712 = vpop.f32.mrf.mxu0
        %v713 = vadd.f32 0.0, %v712
        %714 = vdwg.mxu0
        %v715 = vld [vmem:[%s5] sm:$0xff]
        %v716 = vld [vmem:[%s5 + $0x8] sm:$0xff]
        %v717 = vld [vmem:[%s5 + $0x10] sm:$0xff]
        %v718 = vld [vmem:[%s5 + $0x18] sm:$0xff]
        %v719 = vld [vmem:[%s5 + $0x20] sm:$0xff]
        %v720 = vld [vmem:[%s5 + $0x28] sm:$0xff]
        %v721 = vld [vmem:[%s5 + $0x30] sm:$0xff]
        %v722 = vld [vmem:[%s5 + $0x38] sm:$0xff]
        %v723 = vld [vmem:[%s5 + $0x40] sm:$0xff]
        %v724 = vld [vmem:[%s5 + $0x48] sm:$0xff]
        %v725 = vld [vmem:[%s5 + $0x50] sm:$0xff]
        %v726 = vld [vmem:[%s5 + $0x58] sm:$0xff]
        %v727 = vld [vmem:[%s5 + $0x60] sm:$0xff]
        %v728 = vld [vmem:[%s5 + $0x68] sm:$0xff]
        %v729 = vld [vmem:[%s5 + $0x70] sm:$0xff]
        %v730 = vld [vmem:[%s5 + $0x78] sm:$0xff]
        %v731 = vld [vmem:[%s5 + $0x80] sm:$0xff]
        %v732 = vld [vmem:[%s5 + $0x88] sm:$0xff]
        %v733 = vld [vmem:[%s5 + $0x90] sm:$0xff]
        %v734 = vld [vmem:[%s5 + $0x98] sm:$0xff]
        %v735 = vld [vmem:[%s5 + $0xa0] sm:$0xff]
        %v736 = vld [vmem:[%s5 + $0xa8] sm:$0xff]
        %v737 = vld [vmem:[%s5 + $0xb0] sm:$0xff]
        %v738 = vld [vmem:[%s5 + $0xb8] sm:$0xff]
        %v739 = vld [vmem:[%s5 + $0xc0] sm:$0xff]
        %v740 = vld [vmem:[%s5 + $0xc8] sm:$0xff]
        %v741 = vld [vmem:[%s5 + $0xd0] sm:$0xff]
        %v742 = vld [vmem:[%s5 + $0xd8] sm:$0xff]
        %v743 = vld [vmem:[%s5 + $0xe0] sm:$0xff]
        %v744 = vld [vmem:[%s5 + $0xe8] sm:$0xff]
        %v745 = vld [vmem:[%s5 + $0xf0] sm:$0xff]
        %v746 = vld [vmem:[%s5 + $0xf8] sm:$0xff]
        %v747 = vld [vmem:[%s5 + $0x100] sm:$0xff]
        %v748 = vld [vmem:[%s5 + $0x108] sm:$0xff]
        %v749 = vld [vmem:[%s5 + $0x110] sm:$0xff]
        %v750 = vld [vmem:[%s5 + $0x118] sm:$0xff]
        %751 = vmatpush.msra.mxu0 %v745
        %752 = vmatpush.msra.mxu0 %v743
        %753 = vmatpush.msra.mxu0 %v741
        %754 = vmatpush.msra.mxu0 %v739
        %755 = vmatpush.msra.mxu0 %v737
        %756 = vmatpush.msra.mxu0 %v735
        %757 = vmatpush.msra.mxu0 %v733
        %758 = vmatpush.msra.mxu0 %v731
        %759 = vmatpush.msra.mxu0 %v729
        %760 = vmatpush.msra.mxu0 %v727
        %761 = vmatpush.msra.mxu0 %v725
        %762 = vmatpush.msra.mxu0 %v723
        %763 = vmatpush.msra.mxu0 %v721
        %764 = vmatpush.msra.mxu0 %v719
        %765 = vmatpush.msra.mxu0 %v717
        %766 = vmatpush.msra.mxu0 %v715
        %767 = vmatmul.f32.gmra.mxu0 %v497
        %v768 = vpop.f32.mrf.mxu0
        %v769 = vadd.f32 0.0, %v768
        %770 = vmatmul.f32.gmra.mxu0 %v499
        %v771 = vpop.f32.mrf.mxu0
        %v772 = vadd.f32 0.0, %v771
        %773 = vdwg.mxu0
        %774 = vmatpush.msra.mxu0 0.0
        %775 = vmatpush.msra.mxu0 0.0
        %776 = vmatpush.msra.mxu0 0.0
        %777 = vmatpush.msra.mxu0 0.0
        %778 = vmatpush.msra.mxu0 0.0
        %779 = vmatpush.msra.mxu0 0.0
        %780 = vmatpush.msra.mxu0 0.0
        %781 = vmatpush.msra.mxu0 0.0
        %782 = vmatpush.msra.mxu0 0.0
        %783 = vmatpush.msra.mxu0 0.0
        %784 = vmatpush.msra.mxu0 0.0
        %785 = vmatpush.msra.mxu0 0.0
        %786 = vmatpush.msra.mxu0 0.0
        %787 = vmatpush.msra.mxu0 0.0
        %788 = vmatpush.msra.mxu0 %v749
        %789 = vmatpush.msra.mxu0 %v747
        %790 = vmatmul.f32.gmra.mxu0 %v521
        %v791 = vpop.f32.mrf.mxu0
        %v792 = vadd.f32 %v769, %v791
        %793 = vmatmul.f32.gmra.mxu0 %v524
        %v794 = vpop.f32.mrf.mxu0
        %v795 = vadd.f32 %v772, %v794
        %796 = vdwg.mxu0
        %797 = vmatpush.msra.mxu0 %v746
        %798 = vmatpush.msra.mxu0 %v744
        %799 = vmatpush.msra.mxu0 %v742
        %800 = vmatpush.msra.mxu0 %v740
        %801 = vmatpush.msra.mxu0 %v738
        %802 = vmatpush.msra.mxu0 %v736
        %803 = vmatpush.msra.mxu0 %v734
        %804 = vmatpush.msra.mxu0 %v732
        %805 = vmatpush.msra.mxu0 %v730
        %806 = vmatpush.msra.mxu0 %v728
        %807 = vmatpush.msra.mxu0 %v726
        %808 = vmatpush.msra.mxu0 %v724
        %809 = vmatpush.msra.mxu0 %v722
        %810 = vmatpush.msra.mxu0 %v720
        %811 = vmatpush.msra.mxu0 %v718
        %812 = vmatpush.msra.mxu0 %v716
        %813 = vmatmul.f32.gmra.mxu0 %v497
        %v814 = vpop.f32.mrf.mxu0
        %v815 = vadd.f32 0.0, %v814
        %816 = vmatmul.f32.gmra.mxu0 %v499
        %v817 = vpop.f32.mrf.mxu0
        %v818 = vadd.f32 0.0, %v817
        %819 = vdwg.mxu0
        %820 = vmatpush.msra.mxu0 0.0
        %821 = vmatpush.msra.mxu0 0.0
        %822 = vmatpush.msra.mxu0 0.0
        %823 = vmatpush.msra.mxu0 0.0
        %824 = vmatpush.msra.mxu0 0.0
        %825 = vmatpush.msra.mxu0 0.0
        %826 = vmatpush.msra.mxu0 0.0
        %827 = vmatpush.msra.mxu0 0.0
        %828 = vmatpush.msra.mxu0 0.0
        %829 = vmatpush.msra.mxu0 0.0
        %830 = vmatpush.msra.mxu0 0.0
        %831 = vmatpush.msra.mxu0 0.0
        %832 = vmatpush.msra.mxu0 0.0
        %833 = vmatpush.msra.mxu0 0.0
        %834 = vmatpush.msra.mxu0 %v750
        %835 = vmatpush.msra.mxu0 %v748
        %836 = vmatmul.f32.gmra.mxu0 %v521
        %v837 = vpop.f32.mrf.mxu0
        %v838 = vadd.f32 %v815, %v837
        %839 = vmatmul.f32.gmra.mxu0 %v524
        %v840 = vpop.f32.mrf.mxu0
        %v841 = vadd.f32 %v818, %v840
        %842 = vdwg.mxu0
        %843 = vst [vmem:[#allocation2] sm:$0xff] %v792
        %844 = vst [vmem:[#allocation2 + $0x8] sm:$0xff] %v838
        %845 = vst [vmem:[#allocation2 + $0x10] sm:$0xff] %v795
        %846 = vst [vmem:[#allocation2 + $0x18] sm:$0xff] %v841
        %847 = vst [vmem:[#allocation2 + $0x20] sm:$0xff] %v675
        %848 = vst [vmem:[#allocation2 + $0x28] sm:$0xff] %v704
        %849 = vst [vmem:[#allocation2 + $0x30] sm:$0xff] %v678
        %850 = vst [vmem:[#allocation2 + $0x38] sm:$0xff] %v707
        %851 = vst [vmem:[#allocation2 + $0x40] sm:$0xff] %v681
        %852 = vst [vmem:[#allocation2 + $0x48] sm:$0xff] %v710
        %853 = vst [vmem:[#allocation2 + $0x50] sm:$0xff] %v684
        %854 = vst [vmem:[#allocation2 + $0x58] sm:$0xff] %v713
        %v855 = vld [vmem:[#allocation2] sm:$0xff]
        %v856 = vld [vmem:[#allocation2 + $0x8] sm:$0xff]
        %v857 = vld [vmem:[#allocation2 + $0x10] sm:$0xff]
        %v858 = vld [vmem:[#allocation2 + $0x18] sm:$0xff]
        %v859 = vld [vmem:[#allocation2 + $0x20] sm:$0xff]
        %v860 = vld [vmem:[#allocation2 + $0x28] sm:$0xff]
        %v861 = vld [vmem:[#allocation2 + $0x30] sm:$0xff]
        %v862 = vld [vmem:[#allocation2 + $0x38] sm:$0xff]
        %v863 = vld [vmem:[#allocation2 + $0x40] sm:$0xff]
        %v864 = vld [vmem:[#allocation2 + $0x48] sm:$0xff]
        %v865 = vld [vmem:[#allocation2 + $0x50] sm:$0xff]
        %v866 = vld [vmem:[#allocation2 + $0x58] sm:$0xff]
        %873 = vrot.lane.b32.xlu0 %v856, 17
        %v874 = vpop.permute.xlu0 %873
        %875 = vrot.lane.b32.xlu0 %v858, 17
        %v876 = vpop.permute.xlu0 %875
        %877 = vrot.lane.b32.xlu0 %v860, 17
        %v878 = vpop.permute.xlu0 %877
        %879 = vrot.lane.b32.xlu0 %v862, 17
        %v880 = vpop.permute.xlu0 %879
        %881 = vrot.lane.b32.xlu0 %v864, 17
        %v882 = vpop.permute.xlu0 %881
        %883 = vrot.lane.b32.xlu0 %v866, 17
        %v884 = vpop.permute.xlu0 %883
        %897 = vrot.lane.b32.xlu0 %v855, 17
        %v898 = vpop.permute.xlu0 %897
        %899 = vrot.lane.b32.xlu0 %v857, 17
        %v900 = vpop.permute.xlu0 %899
        %901 = vrot.lane.b32.xlu0 %v859, 17
        %v902 = vpop.permute.xlu0 %901
        %903 = vrot.lane.b32.xlu0 %v861, 17
        %v904 = vpop.permute.xlu0 %903
        %905 = vrot.lane.b32.xlu0 %v863, 17
        %v906 = vpop.permute.xlu0 %905
        %907 = vrot.lane.b32.xlu0 %v865, 17
        %v908 = vpop.permute.xlu0 %907
        %vm909 = vcmask 138240
        %v910 = vsel %vm909, %v898, %v874
        %v911 = vsel %vm909, %v900, %v876
        %v912 = vsel %vm909, %v902, %v878
        %v913 = vsel %vm909, %v904, %v880
        %v914 = vsel %vm909, %v906, %v882
        %v915 = vsel %vm909, %v908, %v884
        %v928 = vsel %vm909, %v874, %v898
        %v929 = vsel %vm909, %v876, %v900
        %v930 = vsel %vm909, %v878, %v902
        %v931 = vsel %vm909, %v880, %v904
        %v932 = vsel %vm909, %v882, %v906
        %v933 = vsel %vm909, %v884, %v908
        %934 = vst [vmem:[#allocation3] sm:$0xff] %v928
        %935 = vst [vmem:[#allocation3 + $0x8] sm:$0xff] %v910
        %936 = vst [vmem:[#allocation3 + $0x10] sm:$0xff] %v929
        %937 = vst [vmem:[#allocation3 + $0x18] sm:$0xff] %v911
        %938 = vst [vmem:[#allocation3 + $0x20] sm:$0xff] %v930
        %939 = vst [vmem:[#allocation3 + $0x28] sm:$0xff] %v912
        %940 = vst [vmem:[#allocation3 + $0x30] sm:$0xff] %v931
        %941 = vst [vmem:[#allocation3 + $0x38] sm:$0xff] %v913
        %942 = vst [vmem:[#allocation3 + $0x40] sm:$0xff] %v932
        %943 = vst [vmem:[#allocation3 + $0x48] sm:$0xff] %v914
        %944 = vst [vmem:[#allocation3 + $0x50] sm:$0xff] %v933
        %945 = vst [vmem:[#allocation3 + $0x58] sm:$0xff] %v915
        %946 = vrot.lane.b32.xlu0 %v856, 16
        %v947 = vpop.permute.xlu0 %946
        %948 = vrot.lane.b32.xlu0 %v858, 16
        %v949 = vpop.permute.xlu0 %948
        %950 = vrot.lane.b32.xlu0 %v860, 16
        %v951 = vpop.permute.xlu0 %950
        %952 = vrot.lane.b32.xlu0 %v862, 16
        %v953 = vpop.permute.xlu0 %952
        %954 = vrot.lane.b32.xlu0 %v864, 16
        %v955 = vpop.permute.xlu0 %954
        %956 = vrot.lane.b32.xlu0 %v866, 16
        %v957 = vpop.permute.xlu0 %956
        %964 = vrot.lane.b32.xlu0 %v855, 16
        %v965 = vpop.permute.xlu0 %964
        %966 = vrot.lane.b32.xlu0 %v857, 16
        %v967 = vpop.permute.xlu0 %966
        %968 = vrot.lane.b32.xlu0 %v859, 16
        %v969 = vpop.permute.xlu0 %968
        %970 = vrot.lane.b32.xlu0 %v861, 16
        %v971 = vpop.permute.xlu0 %970
        %972 = vrot.lane.b32.xlu0 %v863, 16
        %v973 = vpop.permute.xlu0 %972
        %974 = vrot.lane.b32.xlu0 %v865, 16
        %v975 = vpop.permute.xlu0 %974
        %v976 = vsel %vm519, %v965, %v947
        %v977 = vsel %vm519, %v967, %v949
        %v978 = vsel %vm519, %v969, %v951
        %v979 = vsel %vm519, %v971, %v953
        %v980 = vsel %vm519, %v973, %v955
        %v981 = vsel %vm519, %v975, %v957
        %v994 = vsel %vm519, %v947, %v965
        %v995 = vsel %vm519, %v949, %v967
        %v996 = vsel %vm519, %v951, %v969
        %v997 = vsel %vm519, %v953, %v971
        %v998 = vsel %vm519, %v955, %v973
        %v999 = vsel %vm519, %v957, %v975
        %1000 = vst [vmem:[#allocation3 + $0x60] sm:$0xff] %v994
        %1001 = vst [vmem:[#allocation3 + $0x68] sm:$0xff] %v976
        %1002 = vst [vmem:[#allocation3 + $0x70] sm:$0xff] %v995
        %1003 = vst [vmem:[#allocation3 + $0x78] sm:$0xff] %v977
        %1004 = vst [vmem:[#allocation3 + $0x80] sm:$0xff] %v996
        %1005 = vst [vmem:[#allocation3 + $0x88] sm:$0xff] %v978
        %1006 = vst [vmem:[#allocation3 + $0x90] sm:$0xff] %v997
        %1007 = vst [vmem:[#allocation3 + $0x98] sm:$0xff] %v979
        %1008 = vst [vmem:[#allocation3 + $0xa0] sm:$0xff] %v998
        %1009 = vst [vmem:[#allocation3 + $0xa8] sm:$0xff] %v980
        %1010 = vst [vmem:[#allocation3 + $0xb0] sm:$0xff] %v999
        %1011 = vst [vmem:[#allocation3 + $0xb8] sm:$0xff] %v981
        %1012 = vrot.lane.b32.xlu0 %v856, 15
        %v1013 = vpop.permute.xlu0 %1012
        %1014 = vrot.lane.b32.xlu0 %v858, 15
        %v1015 = vpop.permute.xlu0 %1014
        %1016 = vrot.lane.b32.xlu0 %v860, 15
        %v1017 = vpop.permute.xlu0 %1016
        %1018 = vrot.lane.b32.xlu0 %v862, 15
        %v1019 = vpop.permute.xlu0 %1018
        %1020 = vrot.lane.b32.xlu0 %v864, 15
        %v1021 = vpop.permute.xlu0 %1020
        %1022 = vrot.lane.b32.xlu0 %v866, 15
        %v1023 = vpop.permute.xlu0 %1022
        %1030 = vrot.lane.b32.xlu0 %v855, 15
        %v1031 = vpop.permute.xlu0 %1030
        %1032 = vrot.lane.b32.xlu0 %v857, 15
        %v1033 = vpop.permute.xlu0 %1032
        %1034 = vrot.lane.b32.xlu0 %v859, 15
        %v1035 = vpop.permute.xlu0 %1034
        %1036 = vrot.lane.b32.xlu0 %v861, 15
        %v1037 = vpop.permute.xlu0 %1036
        %1038 = vrot.lane.b32.xlu0 %v863, 15
        %v1039 = vpop.permute.xlu0 %1038
        %1040 = vrot.lane.b32.xlu0 %v865, 15
        %v1041 = vpop.permute.xlu0 %1040
        %vm1042 = vcmask 121856
        %v1043 = vsel %vm1042, %v1031, %v1013
        %v1044 = vsel %vm1042, %v1033, %v1015
        %v1045 = vsel %vm1042, %v1035, %v1017
        %v1046 = vsel %vm1042, %v1037, %v1019
        %v1047 = vsel %vm1042, %v1039, %v1021
        %v1048 = vsel %vm1042, %v1041, %v1023
        %v1061 = vsel %vm1042, %v1013, %v1031
        %v1062 = vsel %vm1042, %v1015, %v1033
        %v1063 = vsel %vm1042, %v1017, %v1035
        %v1064 = vsel %vm1042, %v1019, %v1037
        %v1065 = vsel %vm1042, %v1021, %v1039
        %v1066 = vsel %vm1042, %v1023, %v1041
        %1067 = vst [vmem:[#allocation3 + $0xc0] sm:$0xff] %v1061
        %1068 = vst [vmem:[#allocation3 + $0xc8] sm:$0xff] %v1043
        %1069 = vst [vmem:[#allocation3 + $0xd0] sm:$0xff] %v1062
        %1070 = vst [vmem:[#allocation3 + $0xd8] sm:$0xff] %v1044
        %1071 = vst [vmem:[#allocation3 + $0xe0] sm:$0xff] %v1063
        %1072 = vst [vmem:[#allocation3 + $0xe8] sm:$0xff] %v1045
        %1073 = vst [vmem:[#allocation3 + $0xf0] sm:$0xff] %v1064
        %1074 = vst [vmem:[#allocation3 + $0xf8] sm:$0xff] %v1046
        %1075 = vst [vmem:[#allocation3 + $0x100] sm:$0xff] %v1065
        %1076 = vst [vmem:[#allocation3 + $0x108] sm:$0xff] %v1047
        %1077 = vst [vmem:[#allocation3 + $0x110] sm:$0xff] %v1066
        %1078 = vst [vmem:[#allocation3 + $0x118] sm:$0xff] %v1048
        %1079 = vrot.lane.b32.xlu0 %v856, 1
        %v1080 = vpop.permute.xlu0 %1079
        %1081 = vrot.lane.b32.xlu0 %v858, 1
        %v1082 = vpop.permute.xlu0 %1081
        %1083 = vrot.lane.b32.xlu0 %v860, 1
        %v1084 = vpop.permute.xlu0 %1083
        %1085 = vrot.lane.b32.xlu0 %v862, 1
        %v1086 = vpop.permute.xlu0 %1085
        %1087 = vrot.lane.b32.xlu0 %v864, 1
        %v1088 = vpop.permute.xlu0 %1087
        %1089 = vrot.lane.b32.xlu0 %v866, 1
        %v1090 = vpop.permute.xlu0 %1089
        %1097 = vrot.lane.b32.xlu0 %v855, 1
        %v1098 = vpop.permute.xlu0 %1097
        %1099 = vrot.lane.b32.xlu0 %v857, 1
        %v1100 = vpop.permute.xlu0 %1099
        %1101 = vrot.lane.b32.xlu0 %v859, 1
        %v1102 = vpop.permute.xlu0 %1101
        %1103 = vrot.lane.b32.xlu0 %v861, 1
        %v1104 = vpop.permute.xlu0 %1103
        %1105 = vrot.lane.b32.xlu0 %v863, 1
        %v1106 = vpop.permute.xlu0 %1105
        %1107 = vrot.lane.b32.xlu0 %v865, 1
        %v1108 = vpop.permute.xlu0 %1107
        %vm1109 = vcmask 7168
        %v1110 = vsel %vm1109, %v1098, %v1080
        %v1111 = vsel %vm1109, %v1100, %v1082
        %v1112 = vsel %vm1109, %v1102, %v1084
        %v1113 = vsel %vm1109, %v1104, %v1086
        %v1114 = vsel %vm1109, %v1106, %v1088
        %v1115 = vsel %vm1109, %v1108, %v1090
        %v1128 = vsel %vm1109, %v1080, %v1098
        %v1129 = vsel %vm1109, %v1082, %v1100
        %v1130 = vsel %vm1109, %v1084, %v1102
        %v1131 = vsel %vm1109, %v1086, %v1104
        %v1132 = vsel %vm1109, %v1088, %v1106
        %v1133 = vsel %vm1109, %v1090, %v1108
        %1134 = vst [vmem:[#allocation3 + $0x120] sm:$0xff] %v1128
        %1135 = vst [vmem:[#allocation3 + $0x128] sm:$0xff] %v1110
        %1136 = vst [vmem:[#allocation3 + $0x130] sm:$0xff] %v1129
        %1137 = vst [vmem:[#allocation3 + $0x138] sm:$0xff] %v1111
        %1138 = vst [vmem:[#allocation3 + $0x140] sm:$0xff] %v1130
        %1139 = vst [vmem:[#allocation3 + $0x148] sm:$0xff] %v1112
        %1140 = vst [vmem:[#allocation3 + $0x150] sm:$0xff] %v1131
        %1141 = vst [vmem:[#allocation3 + $0x158] sm:$0xff] %v1113
        %1142 = vst [vmem:[#allocation3 + $0x160] sm:$0xff] %v1132
        %1143 = vst [vmem:[#allocation3 + $0x168] sm:$0xff] %v1114
        %1144 = vst [vmem:[#allocation3 + $0x170] sm:$0xff] %v1133
        %1145 = vst [vmem:[#allocation3 + $0x178] sm:$0xff] %v1115
        %1146 = vst [vmem:[#allocation3 + $0x180] sm:$0xff] %v855
        %1147 = vst [vmem:[#allocation3 + $0x188] sm:$0xff] %v856
        %1148 = vst [vmem:[#allocation3 + $0x190] sm:$0xff] %v857
        %1149 = vst [vmem:[#allocation3 + $0x198] sm:$0xff] %v858
        %1150 = vst [vmem:[#allocation3 + $0x1a0] sm:$0xff] %v859
        %1151 = vst [vmem:[#allocation3 + $0x1a8] sm:$0xff] %v860
        %1152 = vst [vmem:[#allocation3 + $0x1b0] sm:$0xff] %v861
        %1153 = vst [vmem:[#allocation3 + $0x1b8] sm:$0xff] %v862
        %1154 = vst [vmem:[#allocation3 + $0x1c0] sm:$0xff] %v863
        %1155 = vst [vmem:[#allocation3 + $0x1c8] sm:$0xff] %v864
        %1156 = vst [vmem:[#allocation3 + $0x1d0] sm:$0xff] %v865
        %1157 = vst [vmem:[#allocation3 + $0x1d8] sm:$0xff] %v866
        %1158 = vrot.lane.b32.xlu0 %v855, 127
        %v1159 = vpop.permute.xlu0 %1158
        %1160 = vrot.lane.b32.xlu0 %v856, 127
        %v1161 = vpop.permute.xlu0 %1160
        %1162 = vrot.lane.b32.xlu0 %v857, 127
        %v1163 = vpop.permute.xlu0 %1162
        %1164 = vrot.lane.b32.xlu0 %v858, 127
        %v1165 = vpop.permute.xlu0 %1164
        %1166 = vrot.lane.b32.xlu0 %v859, 127
        %v1167 = vpop.permute.xlu0 %1166
        %1168 = vrot.lane.b32.xlu0 %v860, 127
        %v1169 = vpop.permute.xlu0 %1168
        %1170 = vrot.lane.b32.xlu0 %v861, 127
        %v1171 = vpop.permute.xlu0 %1170
        %1172 = vrot.lane.b32.xlu0 %v862, 127
        %v1173 = vpop.permute.xlu0 %1172
        %1174 = vrot.lane.b32.xlu0 %v863, 127
        %v1175 = vpop.permute.xlu0 %1174
        %1176 = vrot.lane.b32.xlu0 %v864, 127
        %v1177 = vpop.permute.xlu0 %1176
        %1178 = vrot.lane.b32.xlu0 %v865, 127
        %v1179 = vpop.permute.xlu0 %1178
        %1180 = vrot.lane.b32.xlu0 %v866, 127
        %v1181 = vpop.permute.xlu0 %1180
        %vm1182 = vcmask 1039360
        %v1183 = vsel %vm1182, %v1159, %v1161
        %v1184 = vsel %vm1182, %v1163, %v1165
        %v1185 = vsel %vm1182, %v1167, %v1169
        %v1186 = vsel %vm1182, %v1171, %v1173
        %v1187 = vsel %vm1182, %v1175, %v1177
        %v1188 = vsel %vm1182, %v1179, %v1181
        %v1207 = vsel %vm1182, %v1161, %v1159
        %v1208 = vsel %vm1182, %v1165, %v1163
        %v1209 = vsel %vm1182, %v1169, %v1167
        %v1210 = vsel %vm1182, %v1173, %v1171
        %v1211 = vsel %vm1182, %v1177, %v1175
        %v1212 = vsel %vm1182, %v1181, %v1179
        %1213 = vst [vmem:[#allocation3 + $0x1e0] sm:$0xff] %v1183
        %1214 = vst [vmem:[#allocation3 + $0x1e8] sm:$0xff] %v1207
        %1215 = vst [vmem:[#allocation3 + $0x1f0] sm:$0xff] %v1184
        %1216 = vst [vmem:[#allocation3 + $0x1f8] sm:$0xff] %v1208
        %1217 = vst [vmem:[#allocation3 + $0x200] sm:$0xff] %v1185
        %1218 = vst [vmem:[#allocation3 + $0x208] sm:$0xff] %v1209
        %1219 = vst [vmem:[#allocation3 + $0x210] sm:$0xff] %v1186
        %1220 = vst [vmem:[#allocation3 + $0x218] sm:$0xff] %v1210
        %1221 = vst [vmem:[#allocation3 + $0x220] sm:$0xff] %v1187
        %1222 = vst [vmem:[#allocation3 + $0x228] sm:$0xff] %v1211
        %1223 = vst [vmem:[#allocation3 + $0x230] sm:$0xff] %v1188
        %1224 = vst [vmem:[#allocation3 + $0x238] sm:$0xff] %v1212
        %1225 = vrot.lane.b32.xlu0 %v855, 113
        %v1226 = vpop.permute.xlu0 %1225
        %1227 = vrot.lane.b32.xlu0 %v856, 113
        %v1228 = vpop.permute.xlu0 %1227
        %1229 = vrot.lane.b32.xlu0 %v857, 113
        %v1230 = vpop.permute.xlu0 %1229
        %1231 = vrot.lane.b32.xlu0 %v858, 113
        %v1232 = vpop.permute.xlu0 %1231
        %1233 = vrot.lane.b32.xlu0 %v859, 113
        %v1234 = vpop.permute.xlu0 %1233
        %1235 = vrot.lane.b32.xlu0 %v860, 113
        %v1236 = vpop.permute.xlu0 %1235
        %1237 = vrot.lane.b32.xlu0 %v861, 113
        %v1238 = vpop.permute.xlu0 %1237
        %1239 = vrot.lane.b32.xlu0 %v862, 113
        %v1240 = vpop.permute.xlu0 %1239
        %1241 = vrot.lane.b32.xlu0 %v863, 113
        %v1242 = vpop.permute.xlu0 %1241
        %1243 = vrot.lane.b32.xlu0 %v864, 113
        %v1244 = vpop.permute.xlu0 %1243
        %1245 = vrot.lane.b32.xlu0 %v865, 113
        %v1246 = vpop.permute.xlu0 %1245
        %1247 = vrot.lane.b32.xlu0 %v866, 113
        %v1248 = vpop.permute.xlu0 %1247
        %vm1249 = vcmask 924672
        %v1250 = vsel %vm1249, %v1226, %v1228
        %v1251 = vsel %vm1249, %v1230, %v1232
        %v1252 = vsel %vm1249, %v1234, %v1236
        %v1253 = vsel %vm1249, %v1238, %v1240
        %v1254 = vsel %vm1249, %v1242, %v1244
        %v1255 = vsel %vm1249, %v1246, %v1248
        %v1274 = vsel %vm1249, %v1228, %v1226
        %v1275 = vsel %vm1249, %v1232, %v1230
        %v1276 = vsel %vm1249, %v1236, %v1234
        %v1277 = vsel %vm1249, %v1240, %v1238
        %v1278 = vsel %vm1249, %v1244, %v1242
        %v1279 = vsel %vm1249, %v1248, %v1246
        %1280 = vst [vmem:[#allocation3 + $0x240] sm:$0xff] %v1250
        %1281 = vst [vmem:[#allocation3 + $0x248] sm:$0xff] %v1274
        %1282 = vst [vmem:[#allocation3 + $0x250] sm:$0xff] %v1251
        %1283 = vst [vmem:[#allocation3 + $0x258] sm:$0xff] %v1275
        %1284 = vst [vmem:[#allocation3 + $0x260] sm:$0xff] %v1252
        %1285 = vst [vmem:[#allocation3 + $0x268] sm:$0xff] %v1276
        %1286 = vst [vmem:[#allocation3 + $0x270] sm:$0xff] %v1253
        %1287 = vst [vmem:[#allocation3 + $0x278] sm:$0xff] %v1277
        %1288 = vst [vmem:[#allocation3 + $0x280] sm:$0xff] %v1254
        %1289 = vst [vmem:[#allocation3 + $0x288] sm:$0xff] %v1278
        %1290 = vst [vmem:[#allocation3 + $0x290] sm:$0xff] %v1255
        %1291 = vst [vmem:[#allocation3 + $0x298] sm:$0xff] %v1279
        %1292 = vrot.lane.b32.xlu0 %v855, 112
        %v1293 = vpop.permute.xlu0 %1292
        %1294 = vrot.lane.b32.xlu0 %v856, 112
        %v1295 = vpop.permute.xlu0 %1294
        %1296 = vrot.lane.b32.xlu0 %v857, 112
        %v1297 = vpop.permute.xlu0 %1296
        %1298 = vrot.lane.b32.xlu0 %v858, 112
        %v1299 = vpop.permute.xlu0 %1298
        %1300 = vrot.lane.b32.xlu0 %v859, 112
        %v1301 = vpop.permute.xlu0 %1300
        %1302 = vrot.lane.b32.xlu0 %v860, 112
        %v1303 = vpop.permute.xlu0 %1302
        %1304 = vrot.lane.b32.xlu0 %v861, 112
        %v1305 = vpop.permute.xlu0 %1304
        %1306 = vrot.lane.b32.xlu0 %v862, 112
        %v1307 = vpop.permute.xlu0 %1306
        %1308 = vrot.lane.b32.xlu0 %v863, 112
        %v1309 = vpop.permute.xlu0 %1308
        %1310 = vrot.lane.b32.xlu0 %v864, 112
        %v1311 = vpop.permute.xlu0 %1310
        %1312 = vrot.lane.b32.xlu0 %v865, 112
        %v1313 = vpop.permute.xlu0 %1312
        %1314 = vrot.lane.b32.xlu0 %v866, 112
        %v1315 = vpop.permute.xlu0 %1314
        %vm1316 = vcmask 916480
        %v1317 = vsel %vm1316, %v1293, %v1295
        %v1318 = vsel %vm1316, %v1297, %v1299
        %v1319 = vsel %vm1316, %v1301, %v1303
        %v1320 = vsel %vm1316, %v1305, %v1307
        %v1321 = vsel %vm1316, %v1309, %v1311
        %v1322 = vsel %vm1316, %v1313, %v1315
        %v1341 = vsel %vm1316, %v1295, %v1293
        %v1342 = vsel %vm1316, %v1299, %v1297
        %v1343 = vsel %vm1316, %v1303, %v1301
        %v1344 = vsel %vm1316, %v1307, %v1305
        %v1345 = vsel %vm1316, %v1311, %v1309
        %v1346 = vsel %vm1316, %v1315, %v1313
        %1347 = vst [vmem:[#allocation3 + $0x2a0] sm:$0xff] %v1317
        %1348 = vst [vmem:[#allocation3 + $0x2a8] sm:$0xff] %v1341
        %1349 = vst [vmem:[#allocation3 + $0x2b0] sm:$0xff] %v1318
        %1350 = vst [vmem:[#allocation3 + $0x2b8] sm:$0xff] %v1342
        %1351 = vst [vmem:[#allocation3 + $0x2c0] sm:$0xff] %v1319
        %1352 = vst [vmem:[#allocation3 + $0x2c8] sm:$0xff] %v1343
        %1353 = vst [vmem:[#allocation3 + $0x2d0] sm:$0xff] %v1320
        %1354 = vst [vmem:[#allocation3 + $0x2d8] sm:$0xff] %v1344
        %1355 = vst [vmem:[#allocation3 + $0x2e0] sm:$0xff] %v1321
        %1356 = vst [vmem:[#allocation3 + $0x2e8] sm:$0xff] %v1345
        %1357 = vst [vmem:[#allocation3 + $0x2f0] sm:$0xff] %v1322
        %1358 = vst [vmem:[#allocation3 + $0x2f8] sm:$0xff] %v1346
        %1359 = vrot.lane.b32.xlu0 %v855, 111
        %v1360 = vpop.permute.xlu0 %1359
        %1361 = vrot.lane.b32.xlu0 %v856, 111
        %v1362 = vpop.permute.xlu0 %1361
        %1363 = vrot.lane.b32.xlu0 %v857, 111
        %v1364 = vpop.permute.xlu0 %1363
        %1365 = vrot.lane.b32.xlu0 %v858, 111
        %v1366 = vpop.permute.xlu0 %1365
        %1367 = vrot.lane.b32.xlu0 %v859, 111
        %v1368 = vpop.permute.xlu0 %1367
        %1369 = vrot.lane.b32.xlu0 %v860, 111
        %v1370 = vpop.permute.xlu0 %1369
        %1371 = vrot.lane.b32.xlu0 %v861, 111
        %v1372 = vpop.permute.xlu0 %1371
        %1373 = vrot.lane.b32.xlu0 %v862, 111
        %v1374 = vpop.permute.xlu0 %1373
        %1375 = vrot.lane.b32.xlu0 %v863, 111
        %v1376 = vpop.permute.xlu0 %1375
        %1377 = vrot.lane.b32.xlu0 %v864, 111
        %v1378 = vpop.permute.xlu0 %1377
        %1379 = vrot.lane.b32.xlu0 %v865, 111
        %v1380 = vpop.permute.xlu0 %1379
        %1381 = vrot.lane.b32.xlu0 %v866, 111
        %v1382 = vpop.permute.xlu0 %1381
        %vm1383 = vcmask 908288
        %v1384 = vsel %vm1383, %v1360, %v1362
        %v1385 = vsel %vm1383, %v1364, %v1366
        %v1386 = vsel %vm1383, %v1368, %v1370
        %v1387 = vsel %vm1383, %v1372, %v1374
        %v1388 = vsel %vm1383, %v1376, %v1378
        %v1389 = vsel %vm1383, %v1380, %v1382
        %v1408 = vsel %vm1383, %v1362, %v1360
        %v1409 = vsel %vm1383, %v1366, %v1364
        %v1410 = vsel %vm1383, %v1370, %v1368
        %v1411 = vsel %vm1383, %v1374, %v1372
        %v1412 = vsel %vm1383, %v1378, %v1376
        %v1413 = vsel %vm1383, %v1382, %v1380
        %1414 = vst [vmem:[#allocation3 + $0x300] sm:$0xff] %v1384
        %1415 = vst [vmem:[#allocation3 + $0x308] sm:$0xff] %v1408
        %1416 = vst [vmem:[#allocation3 + $0x310] sm:$0xff] %v1385
        %1417 = vst [vmem:[#allocation3 + $0x318] sm:$0xff] %v1409
        %1418 = vst [vmem:[#allocation3 + $0x320] sm:$0xff] %v1386
        %1419 = vst [vmem:[#allocation3 + $0x328] sm:$0xff] %v1410
        %1420 = vst [vmem:[#allocation3 + $0x330] sm:$0xff] %v1387
        %1421 = vst [vmem:[#allocation3 + $0x338] sm:$0xff] %v1411
        %1422 = vst [vmem:[#allocation3 + $0x340] sm:$0xff] %v1388
        %1423 = vst [vmem:[#allocation3 + $0x348] sm:$0xff] %v1412
        %1424 = vst [vmem:[#allocation3 + $0x350] sm:$0xff] %v1389
        %1425 = vst [vmem:[#allocation3 + $0x358] sm:$0xff] %v1413
        %v1426 = vld [vmem:[%s7] sm:$0xff]
        %v1427 = vld [vmem:[%s7 + $0x8] sm:$0xff]
        %v1428 = vld [vmem:[%s7 + $0x10] sm:$0xff]
        %v1429 = vld [vmem:[%s7 + $0x18] sm:$0xff]
        %v1430 = vld [vmem:[#allocation3] sm:$0xff]
        %v1431 = vld [vmem:[#allocation3 + $0x8] sm:$0xff]
        %v1432 = vld [vmem:[#allocation3 + $0x10] sm:$0xff]
        %v1433 = vld [vmem:[#allocation3 + $0x18] sm:$0xff]
        %v1434 = vld [vmem:[#allocation3 + $0x20] sm:$0xff]
        %v1435 = vld [vmem:[#allocation3 + $0x28] sm:$0xff]
        %v1436 = vld [vmem:[#allocation3 + $0x30] sm:$0xff]
        %v1437 = vld [vmem:[#allocation3 + $0x38] sm:$0xff]
        %v1438 = vld [vmem:[#allocation3 + $0x40] sm:$0xff]
        %v1439 = vld [vmem:[#allocation3 + $0x48] sm:$0xff]
        %v1440 = vld [vmem:[#allocation3 + $0x50] sm:$0xff]
        %v1441 = vld [vmem:[#allocation3 + $0x58] sm:$0xff]
        %v1442 = vld [vmem:[#allocation3 + $0x60] sm:$0xff]
        %v1443 = vld [vmem:[#allocation3 + $0x68] sm:$0xff]
        %v1444 = vld [vmem:[#allocation3 + $0x70] sm:$0xff]
        %v1445 = vld [vmem:[#allocation3 + $0x78] sm:$0xff]
        %v1446 = vld [vmem:[#allocation3 + $0x80] sm:$0xff]
        %v1447 = vld [vmem:[#allocation3 + $0x88] sm:$0xff]
        %v1448 = vld [vmem:[#allocation3 + $0x90] sm:$0xff]
        %v1449 = vld [vmem:[#allocation3 + $0x98] sm:$0xff]
        %v1450 = vld [vmem:[#allocation3 + $0xa0] sm:$0xff]
        %v1451 = vld [vmem:[#allocation3 + $0xa8] sm:$0xff]
        %v1452 = vld [vmem:[#allocation3 + $0xb0] sm:$0xff]
        %v1453 = vld [vmem:[#allocation3 + $0xb8] sm:$0xff]
        %v1454 = vld [vmem:[#allocation3 + $0xc0] sm:$0xff]
        %v1455 = vld [vmem:[#allocation3 + $0xc8] sm:$0xff]
        %v1456 = vld [vmem:[#allocation3 + $0xd0] sm:$0xff]
        %v1457 = vld [vmem:[#allocation3 + $0xd8] sm:$0xff]
        %v1458 = vld [vmem:[#allocation3 + $0xe0] sm:$0xff]
        %v1459 = vld [vmem:[#allocation3 + $0xe8] sm:$0xff]
        %v1460 = vld [vmem:[#allocation3 + $0xf0] sm:$0xff]
        %v1461 = vld [vmem:[#allocation3 + $0xf8] sm:$0xff]
        %v1462 = vld [vmem:[#allocation3 + $0x100] sm:$0xff]
        %v1463 = vld [vmem:[#allocation3 + $0x108] sm:$0xff]
        %v1464 = vld [vmem:[#allocation3 + $0x110] sm:$0xff]
        %v1465 = vld [vmem:[#allocation3 + $0x118] sm:$0xff]
        %v1466 = vld [vmem:[#allocation3 + $0x120] sm:$0xff]
        %v1467 = vld [vmem:[#allocation3 + $0x128] sm:$0xff]
        %v1468 = vld [vmem:[#allocation3 + $0x130] sm:$0xff]
        %v1469 = vld [vmem:[#allocation3 + $0x138] sm:$0xff]
        %v1470 = vld [vmem:[#allocation3 + $0x140] sm:$0xff]
        %v1471 = vld [vmem:[#allocation3 + $0x148] sm:$0xff]
        %v1472 = vld [vmem:[#allocation3 + $0x150] sm:$0xff]
        %v1473 = vld [vmem:[#allocation3 + $0x158] sm:$0xff]
        %v1474 = vld [vmem:[#allocation3 + $0x160] sm:$0xff]
        %v1475 = vld [vmem:[#allocation3 + $0x168] sm:$0xff]
        %v1476 = vld [vmem:[#allocation3 + $0x170] sm:$0xff]
        %v1477 = vld [vmem:[#allocation3 + $0x178] sm:$0xff]
        %v1478 = vld [vmem:[#allocation3 + $0x180] sm:$0xff]
        %v1479 = vld [vmem:[#allocation3 + $0x188] sm:$0xff]
        %v1480 = vld [vmem:[#allocation3 + $0x190] sm:$0xff]
        %v1481 = vld [vmem:[#allocation3 + $0x198] sm:$0xff]
        %v1482 = vld [vmem:[#allocation3 + $0x1a0] sm:$0xff]
        %v1483 = vld [vmem:[#allocation3 + $0x1a8] sm:$0xff]
        %v1484 = vld [vmem:[#allocation3 + $0x1b0] sm:$0xff]
        %v1485 = vld [vmem:[#allocation3 + $0x1b8] sm:$0xff]
        %v1486 = vld [vmem:[#allocation3 + $0x1c0] sm:$0xff]
        %v1487 = vld [vmem:[#allocation3 + $0x1c8] sm:$0xff]
        %v1488 = vld [vmem:[#allocation3 + $0x1d0] sm:$0xff]
        %v1489 = vld [vmem:[#allocation3 + $0x1d8] sm:$0xff]
        %v1490 = vld [vmem:[#allocation3 + $0x1e0] sm:$0xff]
        %v1491 = vld [vmem:[#allocation3 + $0x1e8] sm:$0xff]
        %v1492 = vld [vmem:[#allocation3 + $0x1f0] sm:$0xff]
        %v1493 = vld [vmem:[#allocation3 + $0x1f8] sm:$0xff]
        %v1494 = vld [vmem:[#allocation3 + $0x200] sm:$0xff]
        %v1495 = vld [vmem:[#allocation3 + $0x208] sm:$0xff]
        %v1496 = vld [vmem:[#allocation3 + $0x210] sm:$0xff]
        %v1497 = vld [vmem:[#allocation3 + $0x218] sm:$0xff]
        %v1498 = vld [vmem:[#allocation3 + $0x220] sm:$0xff]
        %v1499 = vld [vmem:[#allocation3 + $0x228] sm:$0xff]
        %v1500 = vld [vmem:[#allocation3 + $0x230] sm:$0xff]
        %v1501 = vld [vmem:[#allocation3 + $0x238] sm:$0xff]
        %v1502 = vld [vmem:[#allocation3 + $0x240] sm:$0xff]
        %v1503 = vld [vmem:[#allocation3 + $0x248] sm:$0xff]
        %v1504 = vld [vmem:[#allocation3 + $0x250] sm:$0xff]
        %v1505 = vld [vmem:[#allocation3 + $0x258] sm:$0xff]
        %v1506 = vld [vmem:[#allocation3 + $0x260] sm:$0xff]
        %v1507 = vld [vmem:[#allocation3 + $0x268] sm:$0xff]
        %v1508 = vld [vmem:[#allocation3 + $0x270] sm:$0xff]
        %v1509 = vld [vmem:[#allocation3 + $0x278] sm:$0xff]
        %v1510 = vld [vmem:[#allocation3 + $0x280] sm:$0xff]
        %v1511 = vld [vmem:[#allocation3 + $0x288] sm:$0xff]
        %v1512 = vld [vmem:[#allocation3 + $0x290] sm:$0xff]
        %v1513 = vld [vmem:[#allocation3 + $0x298] sm:$0xff]
        %v1514 = vld [vmem:[#allocation3 + $0x2a0] sm:$0xff]
        %v1515 = vld [vmem:[#allocation3 + $0x2a8] sm:$0xff]
        %v1516 = vld [vmem:[#allocation3 + $0x2b0] sm:$0xff]
        %v1517 = vld [vmem:[#allocation3 + $0x2b8] sm:$0xff]
        %v1518 = vld [vmem:[#allocation3 + $0x2c0] sm:$0xff]
        %v1519 = vld [vmem:[#allocation3 + $0x2c8] sm:$0xff]
        %v1520 = vld [vmem:[#allocation3 + $0x2d0] sm:$0xff]
        %v1521 = vld [vmem:[#allocation3 + $0x2d8] sm:$0xff]
        %v1522 = vld [vmem:[#allocation3 + $0x2e0] sm:$0xff]
        %v1523 = vld [vmem:[#allocation3 + $0x2e8] sm:$0xff]
        %v1524 = vld [vmem:[#allocation3 + $0x2f0] sm:$0xff]
        %v1525 = vld [vmem:[#allocation3 + $0x2f8] sm:$0xff]
        %v1526 = vld [vmem:[#allocation3 + $0x300] sm:$0xff]
        %v1527 = vld [vmem:[#allocation3 + $0x308] sm:$0xff]
        %v1528 = vld [vmem:[#allocation3 + $0x310] sm:$0xff]
        %v1529 = vld [vmem:[#allocation3 + $0x318] sm:$0xff]
        %v1530 = vld [vmem:[#allocation3 + $0x320] sm:$0xff]
        %v1531 = vld [vmem:[#allocation3 + $0x328] sm:$0xff]
        %v1532 = vld [vmem:[#allocation3 + $0x330] sm:$0xff]
        %v1533 = vld [vmem:[#allocation3 + $0x338] sm:$0xff]
        %v1534 = vld [vmem:[#allocation3 + $0x340] sm:$0xff]
        %v1535 = vld [vmem:[#allocation3 + $0x348] sm:$0xff]
        %v1536 = vld [vmem:[#allocation3 + $0x350] sm:$0xff]
        %v1537 = vld [vmem:[#allocation3 + $0x358] sm:$0xff]
        %v1538 = vld [vmem:[#allocation11] sm:$0xff]
        %1540 = vset.pattern.permute.xlu0 0
        %1541 = vperm.xlu0 %1540, %v1538
        %v1542 = vpop.permute.xlu0 %1541
        %vm1544 = vcmask 392192
        %v1546 = vsel %vm1544, %v1429, 0
        %1548 = vmatpush.msra.mxu0 %v1460
        %1549 = vmatpush.msra.mxu0 %v1458
        %1550 = vmatpush.msra.mxu0 %v1456
        %1551 = vmatpush.msra.mxu0 %v1454
        %1552 = vmatpush.msra.mxu0 %v1452
        %1553 = vmatpush.msra.mxu0 %v1450
        %1554 = vmatpush.msra.mxu0 %v1448
        %1555 = vmatpush.msra.mxu0 %v1446
        %1556 = vmatpush.msra.mxu0 %v1444
        %1557 = vmatpush.msra.mxu0 %v1442
        %1558 = vmatpush.msra.mxu0 %v1440
        %1559 = vmatpush.msra.mxu0 %v1438
        %1560 = vmatpush.msra.mxu0 %v1436
        %1561 = vmatpush.msra.mxu0 %v1434
        %1562 = vmatpush.msra.mxu0 %v1432
        %1563 = vmatpush.msra.mxu0 %v1430
        %1564 = vmatmul.f32.gmra.mxu0 %v1426
        %v1565 = vpop.f32.mrf.mxu0
        %v1566 = vadd.f32 %v1542, %v1565
        %1567 = vdwg.mxu0
        %1568 = vmatpush.msra.mxu0 %v1492
        %1569 = vmatpush.msra.mxu0 %v1490
        %1570 = vmatpush.msra.mxu0 %v1488
        %1571 = vmatpush.msra.mxu0 %v1486
        %1572 = vmatpush.msra.mxu0 %v1484
        %1573 = vmatpush.msra.mxu0 %v1482
        %1574 = vmatpush.msra.mxu0 %v1480
        %1575 = vmatpush.msra.mxu0 %v1478
        %1576 = vmatpush.msra.mxu0 %v1476
        %1577 = vmatpush.msra.mxu0 %v1474
        %1578 = vmatpush.msra.mxu0 %v1472
        %1579 = vmatpush.msra.mxu0 %v1470
        %1580 = vmatpush.msra.mxu0 %v1468
        %1581 = vmatpush.msra.mxu0 %v1466
        %1582 = vmatpush.msra.mxu0 %v1464
        %1583 = vmatpush.msra.mxu0 %v1462
        %1584 = vmatmul.f32.gmra.mxu0 %v1427
        %v1585 = vpop.f32.mrf.mxu0
        %v1586 = vadd.f32 %v1566, %v1585
        %1587 = vdwg.mxu0
        %1588 = vmatpush.msra.mxu0 %v1524
        %1589 = vmatpush.msra.mxu0 %v1522
        %1590 = vmatpush.msra.mxu0 %v1520
        %1591 = vmatpush.msra.mxu0 %v1518
        %1592 = vmatpush.msra.mxu0 %v1516
        %1593 = vmatpush.msra.mxu0 %v1514
        %1594 = vmatpush.msra.mxu0 %v1512
        %1595 = vmatpush.msra.mxu0 %v1510
        %1596 = vmatpush.msra.mxu0 %v1508
        %1597 = vmatpush.msra.mxu0 %v1506
        %1598 = vmatpush.msra.mxu0 %v1504
        %1599 = vmatpush.msra.mxu0 %v1502
        %1600 = vmatpush.msra.mxu0 %v1500
        %1601 = vmatpush.msra.mxu0 %v1498
        %1602 = vmatpush.msra.mxu0 %v1496
        %1603 = vmatpush.msra.mxu0 %v1494
        %1604 = vmatmul.f32.gmra.mxu0 %v1428
        %v1605 = vpop.f32.mrf.mxu0
        %v1606 = vadd.f32 %v1586, %v1605
        %1607 = vdwg.mxu0
        %1608 = vmatpush.msra.mxu0 0.0
        %1609 = vmatpush.msra.mxu0 0.0
        %1610 = vmatpush.msra.mxu0 0.0
        %1611 = vmatpush.msra.mxu0 0.0
        %1612 = vmatpush.msra.mxu0 0.0
        %1613 = vmatpush.msra.mxu0 0.0
        %1614 = vmatpush.msra.mxu0 0.0
        %1615 = vmatpush.msra.mxu0 0.0
        %1616 = vmatpush.msra.mxu0 0.0
        %1617 = vmatpush.msra.mxu0 0.0
        %1618 = vmatpush.msra.mxu0 %v1536
        %1619 = vmatpush.msra.mxu0 %v1534
        %1620 = vmatpush.msra.mxu0 %v1532
        %1621 = vmatpush.msra.mxu0 %v1530
        %1622 = vmatpush.msra.mxu0 %v1528
        %1623 = vmatpush.msra.mxu0 %v1526
        %1624 = vmatmul.f32.gmra.mxu0 %v1546
        %v1625 = vpop.f32.mrf.mxu0
        %v1626 = vadd.f32 %v1606, %v1625
        %1627 = vdwg.mxu0
        %1628 = vmatpush.msra.mxu0 %v1461
        %1629 = vmatpush.msra.mxu0 %v1459
        %1630 = vmatpush.msra.mxu0 %v1457
        %1631 = vmatpush.msra.mxu0 %v1455
        %1632 = vmatpush.msra.mxu0 %v1453
        %1633 = vmatpush.msra.mxu0 %v1451
        %1634 = vmatpush.msra.mxu0 %v1449
        %1635 = vmatpush.msra.mxu0 %v1447
        %1636 = vmatpush.msra.mxu0 %v1445
        %1637 = vmatpush.msra.mxu0 %v1443
        %1638 = vmatpush.msra.mxu0 %v1441
        %1639 = vmatpush.msra.mxu0 %v1439
        %1640 = vmatpush.msra.mxu0 %v1437
        %1641 = vmatpush.msra.mxu0 %v1435
        %1642 = vmatpush.msra.mxu0 %v1433
        %1643 = vmatpush.msra.mxu0 %v1431
        %1644 = vmatmul.f32.gmra.mxu0 %v1426
        %v1645 = vpop.f32.mrf.mxu0
        %v1646 = vadd.f32 %v1542, %v1645
        %1647 = vdwg.mxu0
        %1648 = vmatpush.msra.mxu0 %v1493
        %1649 = vmatpush.msra.mxu0 %v1491
        %1650 = vmatpush.msra.mxu0 %v1489
        %1651 = vmatpush.msra.mxu0 %v1487
        %1652 = vmatpush.msra.mxu0 %v1485
        %1653 = vmatpush.msra.mxu0 %v1483
        %1654 = vmatpush.msra.mxu0 %v1481
        %1655 = vmatpush.msra.mxu0 %v1479
        %1656 = vmatpush.msra.mxu0 %v1477
        %1657 = vmatpush.msra.mxu0 %v1475
        %1658 = vmatpush.msra.mxu0 %v1473
        %1659 = vmatpush.msra.mxu0 %v1471
        %1660 = vmatpush.msra.mxu0 %v1469
        %1661 = vmatpush.msra.mxu0 %v1467
        %1662 = vmatpush.msra.mxu0 %v1465
        %1663 = vmatpush.msra.mxu0 %v1463
        %1664 = vmatmul.f32.gmra.mxu0 %v1427
        %v1665 = vpop.f32.mrf.mxu0
        %v1666 = vadd.f32 %v1646, %v1665
        %1667 = vdwg.mxu0
        %1668 = vmatpush.msra.mxu0 %v1525
        %1669 = vmatpush.msra.mxu0 %v1523
        %1670 = vmatpush.msra.mxu0 %v1521
        %1671 = vmatpush.msra.mxu0 %v1519
        %1672 = vmatpush.msra.mxu0 %v1517
        %1673 = vmatpush.msra.mxu0 %v1515
        %1674 = vmatpush.msra.mxu0 %v1513
        %1675 = vmatpush.msra.mxu0 %v1511
        %1676 = vmatpush.msra.mxu0 %v1509
        %1677 = vmatpush.msra.mxu0 %v1507
        %1678 = vmatpush.msra.mxu0 %v1505
        %1679 = vmatpush.msra.mxu0 %v1503
        %1680 = vmatpush.msra.mxu0 %v1501
        %1681 = vmatpush.msra.mxu0 %v1499
        %1682 = vmatpush.msra.mxu0 %v1497
        %1683 = vmatpush.msra.mxu0 %v1495
        %1684 = vmatmul.f32.gmra.mxu0 %v1428
        %v1685 = vpop.f32.mrf.mxu0
        %v1686 = vadd.f32 %v1666, %v1685
        %1687 = vdwg.mxu0
        %1688 = vmatpush.msra.mxu0 0.0
        %1689 = vmatpush.msra.mxu0 0.0
        %1690 = vmatpush.msra.mxu0 0.0
        %1691 = vmatpush.msra.mxu0 0.0
        %1692 = vmatpush.msra.mxu0 0.0
        %1693 = vmatpush.msra.mxu0 0.0
        %1694 = vmatpush.msra.mxu0 0.0
        %1695 = vmatpush.msra.mxu0 0.0
        %1696 = vmatpush.msra.mxu0 0.0
        %1697 = vmatpush.msra.mxu0 0.0
        %1698 = vmatpush.msra.mxu0 %v1537
        %1699 = vmatpush.msra.mxu0 %v1535
        %1700 = vmatpush.msra.mxu0 %v1533
        %1701 = vmatpush.msra.mxu0 %v1531
        %1702 = vmatpush.msra.mxu0 %v1529
        %1703 = vmatpush.msra.mxu0 %v1527
        %1704 = vmatmul.f32.gmra.mxu0 %v1546
        %v1705 = vpop.f32.mrf.mxu0
        %v1706 = vadd.f32 %v1686, %v1705
        %1707 = vdwg.mxu0
        %v1708 = vmax.f32 %v1626, 0.0
        %v1709 = vmax.f32 %v1706, 0.0
        %v1710 = vld [vmem:[#allocation12] sm:$0x1f]
        %vm1711 = vcmask 64512
        %v1713 = vsel %vm1711, %v1710, 0
        %1715 = vmatpush.msra.mxu0 0.0
        %1716 = vmatpush.msra.mxu0 0.0
        %1717 = vmatpush.msra.mxu0 0.0
        %1718 = vmatpush.msra.mxu0 0.0
        %1719 = vmatpush.msra.mxu0 0.0
        %1720 = vmatpush.msra.mxu0 0.0
        %1721 = vmatpush.msra.mxu0 0.0
        %1722 = vmatpush.msra.mxu0 0.0
        %1723 = vmatpush.msra.mxu0 0.0
        %1724 = vmatpush.msra.mxu0 0.0
        %1725 = vmatpush.msra.mxu0 0.0
        %1726 = vmatpush.msra.mxu0 0.0
        %1727 = vmatpush.msra.mxu0 0.0
        %1728 = vmatpush.msra.mxu0 0.0
        %1729 = vmatpush.msra.mxu0 0.0
        %1730 = vmatpush.msra.mxu0 %v1708
        %1731 = vmatmul.f32.gmra.mxu0 %v1713
        %v1732 = vpop.f32.mrf.mxu0
        %v1733 = vadd.f32 0.0, %v1732
        %1734 = vdwg.mxu0
        %1735 = vmatpush.msra.mxu0 0.0
        %1736 = vmatpush.msra.mxu0 0.0
        %1737 = vmatpush.msra.mxu0 0.0
        %1738 = vmatpush.msra.mxu0 0.0
        %1739 = vmatpush.msra.mxu0 0.0
        %1740 = vmatpush.msra.mxu0 0.0
        %1741 = vmatpush.msra.mxu0 0.0
        %1742 = vmatpush.msra.mxu0 0.0
        %1743 = vmatpush.msra.mxu0 0.0
        %1744 = vmatpush.msra.mxu0 0.0
        %1745 = vmatpush.msra.mxu0 0.0
        %1746 = vmatpush.msra.mxu0 0.0
        %1747 = vmatpush.msra.mxu0 0.0
        %1748 = vmatpush.msra.mxu0 0.0
        %1749 = vmatpush.msra.mxu0 0.0
        %1750 = vmatpush.msra.mxu0 %v1709
        %1751 = vmatmul.f32.gmra.mxu0 %v1713
        %v1752 = vpop.f32.mrf.mxu0
        %v1753 = vadd.f32 0.0, %v1752
        %1754 = vdwg.mxu0
        %v1755 = vld [vmem:[#allocation9] sm:$0xff]
        %v1756 = vld [vmem:[#allocation9 + $0x8] sm:$0xff]
        %v1757 = vld [vmem:[#allocation9 + $0x10] sm:$0xff]
        %v1758 = vld [vmem:[#allocation9 + $0x18] sm:$0xff]
        %v1759 = vld [vmem:[#allocation9 + $0x20] sm:$0xff]
        %v1760 = vld [vmem:[#allocation9 + $0x28] sm:$0xff]
        %v1761 = vld [vmem:[#allocation9 + $0x30] sm:$0xff]
        %v1762 = vld [vmem:[#allocation9 + $0x38] sm:$0xff]
        %v1763 = vld [vmem:[#allocation9 + $0x40] sm:$0xff]
        %v1764 = vld [vmem:[#allocation9 + $0x48] sm:$0xff]
        %v1765 = vld [vmem:[#allocation9 + $0x50] sm:$0xff]
        %v1766 = vld [vmem:[#allocation9 + $0x58] sm:$0xff]
        %v1767 = vld [vmem:[#allocation9 + $0x60] sm:$0xff]
        %v1768 = vld [vmem:[#allocation9 + $0x68] sm:$0xff]
        %v1769 = vld [vmem:[#allocation9 + $0x70] sm:$0xff]
        %v1770 = vld [vmem:[#allocation9 + $0x78] sm:$0xff]
        %v1771 = vld [vmem:[#allocation9 + $0x80] sm:$0xff]
        %v1772 = vld [vmem:[#allocation9 + $0x88] sm:$0xff]
        %v1773 = vld [vmem:[#allocation9 + $0x90] sm:$0xff]
        %v1774 = vld [vmem:[#allocation9 + $0x98] sm:$0xff]
        %v1775 = vld [vmem:[#allocation9 + $0xa0] sm:$0xff]
        %v1776 = vld [vmem:[#allocation9 + $0xa8] sm:$0xff]
        %v1777 = vld [vmem:[#allocation9 + $0xb0] sm:$0xff]
        %v1778 = vld [vmem:[#allocation9 + $0xb8] sm:$0xff]
        %v1779 = vld [vmem:[#allocation9 + $0xc0] sm:$0xff]
        %v1780 = vld [vmem:[#allocation9 + $0xc8] sm:$0xff]
        %v1781 = vld [vmem:[#allocation9 + $0xd0] sm:$0xff]
        %v1782 = vld [vmem:[#allocation9 + $0xd8] sm:$0xff]
        %v1783 = vld [vmem:[#allocation9 + $0xe0] sm:$0xff]
        %v1784 = vld [vmem:[#allocation9 + $0xe8] sm:$0xff]
        %v1785 = vld [vmem:[#allocation9 + $0xf0] sm:$0xff]
        %v1786 = vld [vmem:[#allocation9 + $0xf8] sm:$0xff]
        %v1787 = vld [vmem:[#allocation9 + $0x100] sm:$0xff]
        %v1788 = vld [vmem:[#allocation9 + $0x108] sm:$0xff]
        %v1789 = vld [vmem:[#allocation9 + $0x110] sm:$0xff]
        %v1790 = vld [vmem:[#allocation9 + $0x118] sm:$0xff]
        %v1791 = vld [vmem:[#allocation9 + $0x120] sm:$0xff]
        %v1792 = vld [vmem:[#allocation9 + $0x128] sm:$0xff]
        %v1793 = vld [vmem:[#allocation9 + $0x130] sm:$0xff]
        %v1794 = vld [vmem:[#allocation9 + $0x138] sm:$0xff]
        %v1795 = vld [vmem:[#allocation9 + $0x140] sm:$0xff]
        %v1796 = vld [vmem:[#allocation9 + $0x148] sm:$0xff]
        %v1797 = vld [vmem:[#allocation9 + $0x150] sm:$0xff]
        %v1798 = vld [vmem:[#allocation9 + $0x158] sm:$0xff]
        %v1799 = vld [vmem:[#allocation9 + $0x160] sm:$0xff]
        %v1800 = vld [vmem:[#allocation9 + $0x168] sm:$0xff]
        %v1801 = vld [vmem:[#allocation9 + $0x170] sm:$0xff]
        %v1802 = vld [vmem:[#allocation9 + $0x178] sm:$0xff]
        %v1803 = vld [vmem:[#allocation9 + $0x180] sm:$0xff]
        %v1804 = vld [vmem:[#allocation9 + $0x188] sm:$0xff]
        %v1805 = vld [vmem:[#allocation9 + $0x190] sm:$0xff]
        %v1806 = vld [vmem:[#allocation9 + $0x198] sm:$0xff]
        %v1807 = vld [vmem:[#allocation9 + $0x1a0] sm:$0xff]
        %v1808 = vld [vmem:[#allocation9 + $0x1a8] sm:$0xff]
        %v1809 = vld [vmem:[#allocation9 + $0x1b0] sm:$0xff]
        %v1810 = vld [vmem:[#allocation9 + $0x1b8] sm:$0xff]
        %v1811 = vld [vmem:[#allocation9 + $0x1c0] sm:$0xff]
        %v1812 = vld [vmem:[#allocation9 + $0x1c8] sm:$0xff]
        %v1813 = vld [vmem:[#allocation9 + $0x1d0] sm:$0xff]
        %v1814 = vld [vmem:[#allocation9 + $0x1d8] sm:$0xff]
        %v1815 = vld [vmem:[#allocation9 + $0x1e0] sm:$0xff]
        %v1816 = vld [vmem:[#allocation9 + $0x1e8] sm:$0xff]
        %v1817 = vld [vmem:[#allocation9 + $0x1f0] sm:$0xff]
        %v1818 = vld [vmem:[#allocation9 + $0x1f8] sm:$0xff]
        %v1819 = vld [vmem:[#allocation14] sm:$0x1f]
        %1821 = vset.pattern.permute.xlu0 0
        %1822 = vperm.xlu0 %1821, %v1819
        %v1823 = vpop.permute.xlu0 %1822
        %1825 = vmatpush.msra.mxu0 %v1785
        %1826 = vmatpush.msra.mxu0 %v1783
        %1827 = vmatpush.msra.mxu0 %v1781
        %1828 = vmatpush.msra.mxu0 %v1779
        %1829 = vmatpush.msra.mxu0 %v1777
        %1830 = vmatpush.msra.mxu0 %v1775
        %1831 = vmatpush.msra.mxu0 %v1773
        %1832 = vmatpush.msra.mxu0 %v1771
        %1833 = vmatpush.msra.mxu0 %v1769
        %1834 = vmatpush.msra.mxu0 %v1767
        %1835 = vmatpush.msra.mxu0 %v1765
        %1836 = vmatpush.msra.mxu0 %v1763
        %1837 = vmatpush.msra.mxu0 %v1761
        %1838 = vmatpush.msra.mxu0 %v1759
        %1839 = vmatpush.msra.mxu0 %v1757
        %1840 = vmatpush.msra.mxu0 %v1755
        %1841 = vmatmul.f32.gmra.mxu0 %v1733
        %v1842 = vpop.f32.mrf.mxu0
        %v1843 = vadd.f32 %v1823, %v1842
        %1844 = vdwg.mxu0
        %1845 = vmatpush.msra.mxu0 %v1817
        %1846 = vmatpush.msra.mxu0 %v1815
        %1847 = vmatpush.msra.mxu0 %v1813
        %1848 = vmatpush.msra.mxu0 %v1811
        %1849 = vmatpush.msra.mxu0 %v1809
        %1850 = vmatpush.msra.mxu0 %v1807
        %1851 = vmatpush.msra.mxu0 %v1805
        %1852 = vmatpush.msra.mxu0 %v1803
        %1853 = vmatpush.msra.mxu0 %v1801
        %1854 = vmatpush.msra.mxu0 %v1799
        %1855 = vmatpush.msra.mxu0 %v1797
        %1856 = vmatpush.msra.mxu0 %v1795
        %1857 = vmatpush.msra.mxu0 %v1793
        %1858 = vmatpush.msra.mxu0 %v1791
        %1859 = vmatpush.msra.mxu0 %v1789
        %1860 = vmatpush.msra.mxu0 %v1787
        %1861 = vmatmul.f32.gmra.mxu0 %v1753
        %v1862 = vpop.f32.mrf.mxu0
        %v1863 = vadd.f32 %v1843, %v1862
        %1864 = vdwg.mxu0
        %1865 = vmatpush.msra.mxu0 %v1786
        %1866 = vmatpush.msra.mxu0 %v1784
        %1867 = vmatpush.msra.mxu0 %v1782
        %1868 = vmatpush.msra.mxu0 %v1780
        %1869 = vmatpush.msra.mxu0 %v1778
        %1870 = vmatpush.msra.mxu0 %v1776
        %1871 = vmatpush.msra.mxu0 %v1774
        %1872 = vmatpush.msra.mxu0 %v1772
        %1873 = vmatpush.msra.mxu0 %v1770
        %1874 = vmatpush.msra.mxu0 %v1768
        %1875 = vmatpush.msra.mxu0 %v1766
        %1876 = vmatpush.msra.mxu0 %v1764
        %1877 = vmatpush.msra.mxu0 %v1762
        %1878 = vmatpush.msra.mxu0 %v1760
        %1879 = vmatpush.msra.mxu0 %v1758
        %1880 = vmatpush.msra.mxu0 %v1756
        %1881 = vmatmul.f32.gmra.mxu0 %v1733
        %v1882 = vpop.f32.mrf.mxu0
        %v1883 = vadd.f32 %v1823, %v1882
        %1884 = vdwg.mxu0
        %1885 = vmatpush.msra.mxu0 %v1818
        %1886 = vmatpush.msra.mxu0 %v1816
        %1887 = vmatpush.msra.mxu0 %v1814
        %1888 = vmatpush.msra.mxu0 %v1812
        %1889 = vmatpush.msra.mxu0 %v1810
        %1890 = vmatpush.msra.mxu0 %v1808
        %1891 = vmatpush.msra.mxu0 %v1806
        %1892 = vmatpush.msra.mxu0 %v1804
        %1893 = vmatpush.msra.mxu0 %v1802
        %1894 = vmatpush.msra.mxu0 %v1800
        %1895 = vmatpush.msra.mxu0 %v1798
        %1896 = vmatpush.msra.mxu0 %v1796
        %1897 = vmatpush.msra.mxu0 %v1794
        %1898 = vmatpush.msra.mxu0 %v1792
        %1899 = vmatpush.msra.mxu0 %v1790
        %1900 = vmatpush.msra.mxu0 %v1788
        %1901 = vmatmul.f32.gmra.mxu0 %v1753
        %v1902 = vpop.f32.mrf.mxu0
        %v1903 = vadd.f32 %v1883, %v1902
        %1904 = vdwg.mxu0
        %1905 = vst [vmem:[%s496] sm:$0x1f] %v1863
        %vm1906 = vcmask 126976
        %1907 = vst.msk [vmem:[%s496 + $0x8] sm:$0x1f] %vm1906, %v1903
        %p1908 = scmp.lt.s32.totalorder %s26, 1
        %s1909 = scalar_select %p1908, %s26, 1
        %s1910 = smul.addr %s1909, 2
        %s1911 = smul.addr %s1910, 8
        %s1912 = scalar_lea.vmem %s11, %s1911
        // Predicated region
        $region93: #{_lambda_.1} parent=63 // pred_check
          %p1913 = pneg %p280
        $region94: #{_lambda_.1} parent=63 // pred_check_branch
          %1915 = sbr.rel (%p1913) target = $region96
        $region95: #{_lambda_.1} parent=63 // pred_region
          _
        $region96: #{_lambda_.1} parent=63 // pred_fallthru
          _
      $region64: #{_lambda_.1} parent=5 // pred_fallthru
        _
      %p1916 = scmp.le.s32.totalorder 2, %s21
      // Predicated region
      $region97: #{_lambda_.1} parent=5 // pred_check
        %p1917 = pneg %p1916
      $region98: #{_lambda_.1} parent=5 // pred_check_branch
        %1919 = sbr.rel (%p1917) target = $region100
      $region99: #{_lambda_.1} parent=5 // pred_region
        %s1920 = ssub.s32 %s21, 2
        // Predicated region
        $region101: #{_lambda_.1} parent=99 // pred_check
          %p1921 = pneg %p286
        $region102: #{_lambda_.1} parent=99 // pred_check_branch
          %1923 = sbr.rel (%p1921) target = $region104
        $region103: #{_lambda_.1} parent=99 // pred_region
          %p1924 = scmp.lt.s32.totalorder %s27, 1
          %s1925 = scalar_select %p1924, %s27, 1
          %s1926 = smul.addr %s1925, 2
          %s1927 = smul.addr %s1926, 8
          %s1928 = scalar_lea.vmem %s11, %s1927
        $region104: #{_lambda_.1} parent=99 // pred_fallthru
          _
      $region100: #{_lambda_.1} parent=5 // pred_fallthru
        _
    $region6: #{_lambda_.1} parent=1 // loop_footer
      %s25 = sadd.s32 1, %s21
    $region7: #{_lambda_.1} parent=1 // loop_footer_branch
      %20 = sbr.rel target = $region3
    $region8: #{_lambda_.1} parent=1 // loop_exit
      _
    %1929 = vsyncpa [#allocation5], 1
    %s1930 = scalar_lea.sflag [#allocation5], 1
    %1931 = vsyncpa %s1930, 1
    %1932 = vsyncpa [#allocation7], 1
    %1933 = vsyncpa [#allocation10], 1
    %1934 = vsyncpa [#allocation13], 1

</llo_original>
